<compile_context>
chip_gen: v7x
topology: tpu7x:2x2x1
jax: 0.10.0
libtpu: 0.0.40
codegen_flags: <defaults>
</compile_context>

<pallas_src>
import functools

import jax
import jax.numpy as jnp
from jax.experimental import pallas as pl
from jax.experimental.pallas import tpu as pltpu

_LANE = 128


def _round_up(x, m):
    return ((x + m - 1) // m) * m


def _sage_kernel(nnz_ref, prevk_ref, c_ref, yn_ref, xs_ref, wr_ref, b_ref, invd_ref,
                 o_ref, agg_ref, *, apply_relu, nt_k):
    """One SAGEConv layer, grid = (row tiles, contraction tiles).

      nnz_ref / prevk_ref : SMEM scalar-prefetch, per-tile nonzero count / last
                            nonempty k-tile index (flattened (nt_i*nt_k,))
      c_ref   : (tm, tk)       int8  edge-count tile
      yn_ref  : (tk, Cout_pad) bf16  neighbor features Y = X @ W_l
      xs_ref  : (tm, Cin_pad)  bf16  self features (k-resident)
      wr_ref  : (Cin_pad, Cout_pad) bf16 W_r (resident)
      b_ref   : (1, Cout_pad)  f32   lin_l bias (resident)
      invd_ref: (tm, 1)        f32   1/in_degree (k-resident)
      o_ref   : (tm, Cout_pad)       written once at the last k
      agg_ref : (tm, Cout_pad) f32   VMEM accumulator
    """
    i = pl.program_id(0)
    k = pl.program_id(1)

    @pl.when(k == 0)
    def _():
        agg_ref[...] = jnp.zeros_like(agg_ref)

    # Skip the MXU pass (and, via the index_map, the DMA) for all-zero adjacency tiles.
    @pl.when(nnz_ref[i * nt_k + k] > 0)
    def _():
        # int8 streamed from HBM; widen on the VPU via guaranteed-supported casts.
        a_tile = c_ref[...].astype(jnp.int32).astype(jnp.float32).astype(jnp.bfloat16)
        agg_ref[...] += jnp.dot(a_tile, yn_ref[...],
                                preferred_element_type=jnp.float32)

    @pl.when(k == pl.num_programs(1) - 1)
    def _():
        out = agg_ref[...] * invd_ref[...]                       # exact f32 mean
        out = out + jnp.dot(xs_ref[...], wr_ref[...],
                            preferred_element_type=jnp.float32)  # lin_r(x)
        out = out + b_ref[...]                                   # lin_l bias (once)
        if apply_relu:
            out = jnp.maximum(out, 0.0)
        o_ref[...] = out.astype(o_ref.dtype)


def sage_conv(counts, inv_deg, y_nbr, x_self, w_r, b, *, apply_relu, out_dtype,
              tile=2048):
    """One SAGEConv layer over padded operands.

    counts: (N_pad, N_pad) int8 edge counts; inv_deg: (N_pad, 1) f32;
    y_nbr:  (N_pad, Cout_pad) bf16 (= X @ W_l); x_self: (N_pad, Cin_pad) bf16;
    w_r:    (Cin_pad, Cout_pad) bf16; b: (1, Cout_pad) f32.
    Returns (N_pad, Cout_pad) in out_dtype.
    """
    n_pad = counts.shape[0]
    c_in = x_self.shape[1]
    c_out = y_nbr.shape[1]

    if n_pad > tile:
        assert n_pad % tile == 0
        tm = tk = tile
    else:
        tk = n_pad
        # >= 2 row tiles so the "parallel" axis can be sharded across v7x's 2 TCs.
        # n_pad is a multiple of 128, so tm is a multiple of 64 (int8/bf16 tile safe).
        tm = n_pad // 2
    nt_i, nt_k = n_pad // tm, n_pad // tk

    # Per-tile block-sparsity metadata (cheap XLA reduction over the int8 counts).
    nz_tiles = (counts != 0).reshape(nt_i, tm, nt_k, tk)
    nnz = jnp.sum(nz_tiles, axis=(1, 3), dtype=jnp.int32)                  # (nt_i, nt_k)
    ks = jnp.arange(nt_k, dtype=jnp.int32)[None, :]
    prev_k = jax.lax.cummax(jnp.where(nnz > 0, ks, -1), axis=1)            # last nonempty k
    prev_k = jnp.maximum(prev_k, 0).astype(jnp.int32)
    nnz_flat = nnz.reshape(-1)
    prevk_flat = prev_k.reshape(-1)

    kernel = functools.partial(_sage_kernel, apply_relu=apply_relu, nt_k=nt_k)

    # index_maps receive the scalar-prefetch refs positionally after the grid indices.
    a_map = lambda i, k, nnz_r, pk_r: (i, pk_r[i * nt_k + k])      # re-use prev block if empty
    y_map = lambda i, k, nnz_r, pk_r: (pk_r[i * nt_k + k], 0)
    row_map = lambda i, k, nnz_r, pk_r: (i, 0)
    const_map = lambda i, k, nnz_r, pk_r: (0, 0)

    flops = 2 * n_pad * n_pad * c_out + 2 * n_pad * c_in * c_out
    bytes_accessed = (counts.size + 2 * y_nbr.size + 2 * x_self.size + 2 * w_r.size
                      + 4 * b.size + 4 * inv_deg.size
                      + n_pad * c_out * jnp.dtype(out_dtype).itemsize)

    return pl.pallas_call(
        kernel,
        out_shape=jax.ShapeDtypeStruct((n_pad, c_out), out_dtype),
        grid_spec=pltpu.PrefetchScalarGridSpec(
            num_scalar_prefetch=2,
            grid=(nt_i, nt_k),
            in_specs=[
                pl.BlockSpec((tm, tk), a_map),         # int8 edge-count tile
                pl.BlockSpec((tk, c_out), y_map),      # neighbor features Y = X @ W_l
                pl.BlockSpec((tm, c_in), row_map),     # self features (k-resident)
                pl.BlockSpec((c_in, c_out), const_map),  # W_r (resident)
                pl.BlockSpec((1, c_out), const_map),   # bias (resident)
                pl.BlockSpec((tm, 1), row_map),        # 1/deg (k-resident)
            ],
            out_specs=pl.BlockSpec((tm, c_out), row_map),
            scratch_shapes=[pltpu.VMEM((tm, c_out), jnp.float32)],
        ),
        compiler_params=pltpu.CompilerParams(
            dimension_semantics=("parallel", "arbitrary"),
            vmem_limit_bytes=48 * 1024 * 1024,
        ),
        cost_estimate=pl.CostEstimate(
            flops=int(flops), transcendentals=0, bytes_accessed=int(bytes_accessed)),
    )(nnz_flat, prevk_flat, counts, y_nbr, x_self, w_r, b, inv_deg)


def build_graph_operands(edge_index, n_pad):
    """Exact int8 edge counts C[i,j] = #edges j->i and f32 1/in_degree (no f32 N^2 temp).

    Rows with zero in-degree keep agg == 0 (matches scatter-mean); padded rows/cols are 0.
    """
    src = edge_index[0]
    dst = edge_index[1]
    counts = jnp.zeros((n_pad, n_pad), jnp.int8).at[dst, src].add(
        jnp.ones_like(src, dtype=jnp.int8))
    deg = jnp.zeros((n_pad,), jnp.float32).at[dst].add(1.0)       # segment-sum over edges
    inv_deg = (1.0 / jnp.maximum(deg, 1.0)).reshape(n_pad, 1)
    return counts, inv_deg


def gnn_forward(x, edge_index, params, *, tile=2048):
    n, c_in = x.shape
    h_dim = params["w_l1"].shape[1]
    c_out = params["w_l2"].shape[1]

    # Node count padded to a tile multiple (pad tiles are skipped by the block-sparse
    # metadata); feature axes padded to lane-dense multiples of 128.
    n_pad = _round_up(n, tile) if n > tile else _round_up(n, _LANE)
    c_in_pad = _round_up(c_in, _LANE)
    h_pad = _round_up(h_dim, _LANE)
    c_out_pad = _round_up(c_out, _LANE)

    counts, inv_deg = build_graph_operands(edge_index, n_pad)

    x_pad_f32 = jnp.zeros((n_pad, c_in_pad), jnp.float32).at[:n, :c_in].set(x)
    x_bf16 = x_pad_f32.astype(jnp.bfloat16)

    def pad_w(w, rows, cols, dtype):
        return jnp.zeros((rows, cols), dtype).at[:w.shape[0], :w.shape[1]].set(
            w.astype(dtype))

    w_l1 = pad_w(params["w_l1"], c_in_pad, h_pad, jnp.float32)
    w_r1 = pad_w(params["w_r1"], c_in_pad, h_pad, jnp.bfloat16)
    b1 = jnp.zeros((1, h_pad), jnp.float32).at[:, :h_dim].set(params["b1"])
    w_l2 = pad_w(params["w_l2"], h_pad, c_out_pad, jnp.float32)
    w_r2 = pad_w(params["w_r2"], h_pad, c_out_pad, jnp.bfloat16)
    b2 = jnp.zeros((1, c_out_pad), jnp.float32).at[:, :c_out].set(params["b2"])

    # Layer 1 (+ fused relu).  Y1 = X @ W_l1 is a tiny XLA matmul (fold W_l into agg).
    y1 = jnp.dot(x_pad_f32, w_l1).astype(jnp.bfloat16)
    h = sage_conv(counts, inv_deg, y1, x_bf16, w_r1, b1,
                  apply_relu=True, out_dtype=jnp.bfloat16, tile=tile)

    # Layer 2.
    y2 = jnp.dot(h.astype(jnp.float32), w_l2).astype(jnp.bfloat16)
    out = sage_conv(counts, inv_deg, y2, h, w_r2, b2,
                    apply_relu=False, out_dtype=jnp.float32, tile=tile)
    return out[:n, :c_out]


def init_params(key, in_channels, hidden_channels, out_channels):
    ks = jax.random.split(key, 4)

    def lin(k, fan_in, fan_out):
        bound = 1.0 / jnp.sqrt(fan_in)
        return jax.random.uniform(k, (fan_in, fan_out), jnp.float32, -bound, bound)

    return {
        # conv1
        "w_l1": lin(ks[0], in_channels, hidden_channels),
        "w_r1": lin(ks[1], in_channels, hidden_channels),
        "b1": jnp.zeros((1, hidden_channels), jnp.float32),
        # conv2
        "w_l2": lin(ks[2], hidden_channels, out_channels),
        "w_r2": lin(ks[3], hidden_channels, out_channels),
        "b2": jnp.zeros((1, out_channels), jnp.float32),
    }


if __name__ == "__main__":
    in_channels, hidden_channels, out_channels = 4, 32, 8
    num_nodes, num_edges = 16, 40

    key = jax.random.PRNGKey(0)
    k_x, k_src, k_dst, k_p = jax.random.split(key, 4)

    x = jax.random.normal(k_x, (num_nodes, in_channels), jnp.float32)
    edge_index = jnp.stack(
        [
            jax.random.randint(k_src, (num_edges,), 0, num_nodes),
            jax.random.randint(k_dst, (num_edges,), 0, num_nodes),
        ],
        axis=0,
    ).astype(jnp.int32)

    params = init_params(k_p, in_channels, hidden_channels, out_channels)

    out = jax.jit(gnn_forward)(x, edge_index, params)
    jax.block_until_ready(out)
    assert out.shape == (num_nodes, out_channels)
    print("KERNEL_OK")
</pallas_src>

<mosaic_0001>
module attributes {stable_mosaic.version = 11 : i64} {
  func.func @_sage_kernel(%arg0: i32, %arg1: i32, %arg2: memref<2xi32, #tpu.memory_space<smem>>, %arg3: memref<2xi32, #tpu.memory_space<smem>>, %arg4: memref<64x128xi8, #tpu.memory_space<vmem>>, %arg5: memref<128x128xbf16, #tpu.memory_space<vmem>>, %arg6: memref<64x128xbf16, #tpu.memory_space<vmem>>, %arg7: memref<128x128xbf16, #tpu.memory_space<vmem>>, %arg8: memref<1x128xf32, #tpu.memory_space<vmem>>, %arg9: memref<64x1xf32, #tpu.memory_space<vmem>>, %arg10: memref<64x128xbf16, #tpu.memory_space<vmem>>, %arg11: memref<64x128xf32, #tpu.memory_space<vmem>>) attributes {dimension_semantics = [#tpu.dimension_semantics<parallel>, #tpu.dimension_semantics<arbitrary>], iteration_bounds = array<i64: 2, 1>, scalar_prefetch = 2 : i64, scratch_operands = 1 : i64, tpu.core_type = #tpu.core_type<tc>, window_params = [{transform_indices = @transform_0, window_bounds = array<i64: 64, 128>}, {transform_indices = @transform_1, window_bounds = array<i64: 128, 128>}, {transform_indices = @transform_2, window_bounds = array<i64: 64, 128>}, {pipeline_mode = #tpu.pipeline_mode<synchronous>, transform_indices = @transform_3, window_bounds = array<i64: 128, 128>}, {pipeline_mode = #tpu.pipeline_mode<synchronous>, transform_indices = @transform_4, window_bounds = array<i64: 1, 128>}, {transform_indices = @transform_5, window_bounds = array<i64: 64, 1>}, {transform_indices = @transform_6, window_bounds = array<i64: 64, 128>}]} {
    %c0_i32 = arith.constant 0 : i32
    %0 = arith.cmpi eq, %arg1, %c0_i32 : i32
    %1 = arith.extui %0 : i1 to i32
    %c0_i32_0 = arith.constant 0 : i32
    %2 = arith.cmpi ne, %1, %c0_i32_0 : i32
    scf.if %2 {
      %cst = arith.constant 0.000000e+00 : f32
      %13 = vector.broadcast %cst : f32 to vector<64x128xf32>
      %c0 = arith.constant 0 : index
      %c0_5 = arith.constant 0 : index
      %14 = vector.load %arg11[%c0, %c0_5] : memref<64x128xf32, #tpu.memory_space<vmem>>, vector<64x128xf32>
      tpu.vector_store %arg11[%c0, %c0_5], %13 {strides = array<i32>} : memref<64x128xf32, #tpu.memory_space<vmem>>, vector<64x128xf32>,
    } else {
    }
    %c1_i32 = arith.constant 1 : i32
    %3 = arith.muli %arg0, %c1_i32 : i32
    %4 = arith.addi %3, %arg1 : i32
    %5 = arith.index_cast %4 : i32 to index
    %6 = memref.load %arg2[%5] : memref<2xi32, #tpu.memory_space<smem>>
    %c0_i32_1 = arith.constant 0 : i32
    %7 = arith.cmpi sgt, %6, %c0_i32_1 : i32
    %8 = arith.extui %7 : i1 to i32
    %c0_i32_2 = arith.constant 0 : i32
    %9 = arith.cmpi ne, %8, %c0_i32_2 : i32
    scf.if %9 {
      %c0 = arith.constant 0 : index
      %c0_5 = arith.constant 0 : index
      %13 = vector.load %arg4[%c0, %c0_5] : memref<64x128xi8, #tpu.memory_space<vmem>>, vector<64x128xi8>
      %14 = arith.extsi %13 : vector<64x128xi8> to vector<64x128xi32>
      %15 = arith.sitofp %14 : vector<64x128xi32> to vector<64x128xf32>
      %16 = arith.truncf %15 : vector<64x128xf32> to vector<64x128xbf16>
      %c0_6 = arith.constant 0 : index
      %c0_7 = arith.constant 0 : index
      %17 = vector.load %arg11[%c0_6, %c0_7] : memref<64x128xf32, #tpu.memory_space<vmem>>, vector<64x128xf32>
      %c0_8 = arith.constant 0 : index
      %c0_9 = arith.constant 0 : index
      %18 = vector.load %arg5[%c0_8, %c0_9] : memref<128x128xbf16, #tpu.memory_space<vmem>>, vector<128x128xbf16>
      %cst = arith.constant dense<0.000000e+00> : vector<64x128xf32>
      %19 = tpu.matmul %16, %18, %cst {dimension_numbers = #tpu.dot_dimension_numbers<[1], [0], [0], [1], [0, 0, 1, 1], [], []>} : vector<64x128xbf16>, vector<128x128xbf16>, vector<64x128xf32> -> vector<64x128xf32>
      %20 = arith.addf %17, %19 : vector<64x128xf32>
      %c0_10 = arith.constant 0 : index
      %c0_11 = arith.constant 0 : index
      %21 = vector.load %arg11[%c0_10, %c0_11] : memref<64x128xf32, #tpu.memory_space<vmem>>, vector<64x128xf32>
      tpu.vector_store %arg11[%c0_10, %c0_11], %20 {strides = array<i32>} : memref<64x128xf32, #tpu.memory_space<vmem>>, vector<64x128xf32>,
    } else {
    }
    %c0_i32_3 = arith.constant 0 : i32
    %10 = arith.cmpi eq, %arg1, %c0_i32_3 : i32
    %11 = arith.extui %10 : i1 to i32
    %c0_i32_4 = arith.constant 0 : i32
    %12 = arith.cmpi ne, %11, %c0_i32_4 : i32
    scf.if %12 {
      %c0 = arith.constant 0 : index
      %c0_5 = arith.constant 0 : index
      %13 = vector.load %arg11[%c0, %c0_5] : memref<64x128xf32, #tpu.memory_space<vmem>>, vector<64x128xf32>
      %c0_6 = arith.constant 0 : index
      %c0_7 = arith.constant 0 : index
      %14 = vector.load %arg9[%c0_6, %c0_7] : memref<64x1xf32, #tpu.memory_space<vmem>>, vector<64x1xf32>
      %15 = vector.broadcast %14 : vector<64x1xf32> to vector<64x128xf32>
      %16 = arith.mulf %13, %15 : vector<64x128xf32>
      %c0_8 = arith.constant 0 : index
      %c0_9 = arith.constant 0 : index
      %17 = vector.load %arg6[%c0_8, %c0_9] : memref<64x128xbf16, #tpu.memory_space<vmem>>, vector<64x128xbf16>
      %c0_10 = arith.constant 0 : index
      %c0_11 = arith.constant 0 : index
      %18 = vector.load %arg7[%c0_10, %c0_11] : memref<128x128xbf16, #tpu.memory_space<vmem>>, vector<128x128xbf16>
      %cst = arith.constant dense<0.000000e+00> : vector<64x128xf32>
      %19 = tpu.matmul %17, %18, %cst {dimension_numbers = #tpu.dot_dimension_numbers<[1], [0], [0], [1], [0, 0, 1, 1], [], []>} : vector<64x128xbf16>, vector<128x128xbf16>, vector<64x128xf32> -> vector<64x128xf32>
      %20 = arith.addf %16, %19 : vector<64x128xf32>
      %c0_12 = arith.constant 0 : index
      %c0_13 = arith.constant 0 : index
      %21 = vector.load %arg8[%c0_12, %c0_13] : memref<1x128xf32, #tpu.memory_space<vmem>>, vector<1x128xf32>
      %22 = vector.broadcast %21 : vector<1x128xf32> to vector<64x128xf32>
      %23 = arith.addf %20, %22 : vector<64x128xf32>
      %cst_14 = arith.constant 0.000000e+00 : f32
      %24 = vector.broadcast %cst_14 : f32 to vector<64x128xf32>
      %25 = arith.maximumf %23, %24 : vector<64x128xf32>
      %26 = arith.truncf %25 : vector<64x128xf32> to vector<64x128xbf16>
      %c0_15 = arith.constant 0 : index
      %c0_16 = arith.constant 0 : index
      %27 = vector.load %arg10[%c0_15, %c0_16] : memref<64x128xbf16, #tpu.memory_space<vmem>>, vector<64x128xbf16>
      tpu.vector_store %arg10[%c0_15, %c0_16], %26 {strides = array<i32>} : memref<64x128xbf16, #tpu.memory_space<vmem>>, vector<64x128xbf16>,
    } else {
    }
    return
  }
  func.func @transform_0(%arg0: i32, %arg1: i32, %arg2: memref<2xi32, #tpu.memory_space<smem>>, %arg3: memref<2xi32, #tpu.memory_space<smem>>) -> (i32, i32) {
    %c1_i32 = arith.constant 1 : i32
    %0 = arith.muli %arg0, %c1_i32 : i32
    %1 = arith.addi %0, %arg1 : i32
    %2 = arith.index_cast %1 : i32 to index
    %3 = memref.load %arg3[%2] : memref<2xi32, #tpu.memory_space<smem>>
    %c0_i32 = arith.constant 0 : i32
    return %arg0, %3 : i32, i32
  }
  func.func @transform_1(%arg0: i32, %arg1: i32, %arg2: memref<2xi32, #tpu.memory_space<smem>>, %arg3: memref<2xi32, #tpu.memory_space<smem>>) -> (i32, i32) {
    %c1_i32 = arith.constant 1 : i32
    %0 = arith.muli %arg0, %c1_i32 : i32
    %1 = arith.addi %0, %arg1 : i32
    %2 = arith.index_cast %1 : i32 to index
    %3 = memref.load %arg3[%2] : memref<2xi32, #tpu.memory_space<smem>>
    %c0_i32 = arith.constant 0 : i32
    %c0_i32_0 = arith.constant 0 : i32
    return %3, %c0_i32 : i32, i32
  }
  func.func @transform_2(%arg0: i32, %arg1: i32, %arg2: memref<2xi32, #tpu.memory_space<smem>>, %arg3: memref<2xi32, #tpu.memory_space<smem>>) -> (i32, i32) {
    %c0_i32 = arith.constant 0 : i32
    %c0_i32_0 = arith.constant 0 : i32
    return %arg0, %c0_i32 : i32, i32
  }
  func.func @transform_3(%arg0: i32, %arg1: i32, %arg2: memref<2xi32, #tpu.memory_space<smem>>, %arg3: memref<2xi32, #tpu.memory_space<smem>>) -> (i32, i32) {
    %c0_i32 = arith.constant 0 : i32
    %c0_i32_0 = arith.constant 0 : i32
    %c0_i32_1 = arith.constant 0 : i32
    return %c0_i32, %c0_i32_0 : i32, i32
  }
  func.func @transform_4(%arg0: i32, %arg1: i32, %arg2: memref<2xi32, #tpu.memory_space<smem>>, %arg3: memref<2xi32, #tpu.memory_space<smem>>) -> (i32, i32) {
    %c0_i32 = arith.constant 0 : i32
    %c0_i32_0 = arith.constant 0 : i32
    %c0_i32_1 = arith.constant 0 : i32
    return %c0_i32, %c0_i32_0 : i32, i32
  }
  func.func @transform_5(%arg0: i32, %arg1: i32, %arg2: memref<2xi32, #tpu.memory_space<smem>>, %arg3: memref<2xi32, #tpu.memory_space<smem>>) -> (i32, i32) {
    %c0_i32 = arith.constant 0 : i32
    %c0_i32_0 = arith.constant 0 : i32
    return %arg0, %c0_i32 : i32, i32
  }
  func.func @transform_6(%arg0: i32, %arg1: i32, %arg2: memref<2xi32, #tpu.memory_space<smem>>, %arg3: memref<2xi32, #tpu.memory_space<smem>>) -> (i32, i32) {
    %c0_i32 = arith.constant 0 : i32
    %c0_i32_0 = arith.constant 0 : i32
    return %arg0, %c0_i32 : i32, i32
  }
}

module attributes {stable_mosaic.version = 11 : i64} {
  func.func @_sage_kernel(%arg0: i32, %arg1: i32, %arg2: memref<2xi32, #tpu.memory_space<smem>>, %arg3: memref<2xi32, #tpu.memory_space<smem>>, %arg4: memref<64x128xi8, #tpu.memory_space<vmem>>, %arg5: memref<128x128xbf16, #tpu.memory_space<vmem>>, %arg6: memref<64x128xbf16, #tpu.memory_space<vmem>>, %arg7: memref<128x128xbf16, #tpu.memory_space<vmem>>, %arg8: memref<1x128xf32, #tpu.memory_space<vmem>>, %arg9: memref<64x1xf32, #tpu.memory_space<vmem>>, %arg10: memref<64x128xf32, #tpu.memory_space<vmem>>, %arg11: memref<64x128xf32, #tpu.memory_space<vmem>>) attributes {dimension_semantics = [#tpu.dimension_semantics<parallel>, #tpu.dimension_semantics<arbitrary>], iteration_bounds = array<i64: 2, 1>, scalar_prefetch = 2 : i64, scratch_operands = 1 : i64, tpu.core_type = #tpu.core_type<tc>, window_params = [{transform_indices = @transform_0, window_bounds = array<i64: 64, 128>}, {transform_indices = @transform_1, window_bounds = array<i64: 128, 128>}, {transform_indices = @transform_2, window_bounds = array<i64: 64, 128>}, {pipeline_mode = #tpu.pipeline_mode<synchronous>, transform_indices = @transform_3, window_bounds = array<i64: 128, 128>}, {pipeline_mode = #tpu.pipeline_mode<synchronous>, transform_indices = @transform_4, window_bounds = array<i64: 1, 128>}, {transform_indices = @transform_5, window_bounds = array<i64: 64, 1>}, {transform_indices = @transform_6, window_bounds = array<i64: 64, 128>}]} {
    %c0_i32 = arith.constant 0 : i32
    %0 = arith.cmpi eq, %arg1, %c0_i32 : i32
    %1 = arith.extui %0 : i1 to i32
    %c0_i32_0 = arith.constant 0 : i32
    %2 = arith.cmpi ne, %1, %c0_i32_0 : i32
    scf.if %2 {
      %cst = arith.constant 0.000000e+00 : f32
      %13 = vector.broadcast %cst : f32 to vector<64x128xf32>
      %c0 = arith.constant 0 : index
      %c0_5 = arith.constant 0 : index
      %14 = vector.load %arg11[%c0, %c0_5] : memref<64x128xf32, #tpu.memory_space<vmem>>, vector<64x128xf32>
      tpu.vector_store %arg11[%c0, %c0_5], %13 {strides = array<i32>} : memref<64x128xf32, #tpu.memory_space<vmem>>, vector<64x128xf32>,
    } else {
    }
    %c1_i32 = arith.constant 1 : i32
    %3 = arith.muli %arg0, %c1_i32 : i32
    %4 = arith.addi %3, %arg1 : i32
    %5 = arith.index_cast %4 : i32 to index
    %6 = memref.load %arg2[%5] : memref<2xi32, #tpu.memory_space<smem>>
    %c0_i32_1 = arith.constant 0 : i32
    %7 = arith.cmpi sgt, %6, %c0_i32_1 : i32
    %8 = arith.extui %7 : i1 to i32
    %c0_i32_2 = arith.constant 0 : i32
    %9 = arith.cmpi ne, %8, %c0_i32_2 : i32
    scf.if %9 {
      %c0 = arith.constant 0 : index
      %c0_5 = arith.constant 0 : index
      %13 = vector.load %arg4[%c0, %c0_5] : memref<64x128xi8, #tpu.memory_space<vmem>>, vector<64x128xi8>
      %14 = arith.extsi %13 : vector<64x128xi8> to vector<64x128xi32>
      %15 = arith.sitofp %14 : vector<64x128xi32> to vector<64x128xf32>
      %16 = arith.truncf %15 : vector<64x128xf32> to vector<64x128xbf16>
      %c0_6 = arith.constant 0 : index
      %c0_7 = arith.constant 0 : index
      %17 = vector.load %arg11[%c0_6, %c0_7] : memref<64x128xf32, #tpu.memory_space<vmem>>, vector<64x128xf32>
      %c0_8 = arith.constant 0 : index
      %c0_9 = arith.constant 0 : index
      %18 = vector.load %arg5[%c0_8, %c0_9] : memref<128x128xbf16, #tpu.memory_space<vmem>>, vector<128x128xbf16>
      %cst = arith.constant dense<0.000000e+00> : vector<64x128xf32>
      %19 = tpu.matmul %16, %18, %cst {dimension_numbers = #tpu.dot_dimension_numbers<[1], [0], [0], [1], [0, 0, 1, 1], [], []>} : vector<64x128xbf16>, vector<128x128xbf16>, vector<64x128xf32> -> vector<64x128xf32>
      %20 = arith.addf %17, %19 : vector<64x128xf32>
      %c0_10 = arith.constant 0 : index
      %c0_11 = arith.constant 0 : index
      %21 = vector.load %arg11[%c0_10, %c0_11] : memref<64x128xf32, #tpu.memory_space<vmem>>, vector<64x128xf32>
      tpu.vector_store %arg11[%c0_10, %c0_11], %20 {strides = array<i32>} : memref<64x128xf32, #tpu.memory_space<vmem>>, vector<64x128xf32>,
    } else {
    }
    %c0_i32_3 = arith.constant 0 : i32
    %10 = arith.cmpi eq, %arg1, %c0_i32_3 : i32
    %11 = arith.extui %10 : i1 to i32
    %c0_i32_4 = arith.constant 0 : i32
    %12 = arith.cmpi ne, %11, %c0_i32_4 : i32
    scf.if %12 {
      %c0 = arith.constant 0 : index
      %c0_5 = arith.constant 0 : index
      %13 = vector.load %arg11[%c0, %c0_5] : memref<64x128xf32, #tpu.memory_space<vmem>>, vector<64x128xf32>
      %c0_6 = arith.constant 0 : index
      %c0_7 = arith.constant 0 : index
      %14 = vector.load %arg9[%c0_6, %c0_7] : memref<64x1xf32, #tpu.memory_space<vmem>>, vector<64x1xf32>
      %15 = vector.broadcast %14 : vector<64x1xf32> to vector<64x128xf32>
      %16 = arith.mulf %13, %15 : vector<64x128xf32>
      %c0_8 = arith.constant 0 : index
      %c0_9 = arith.constant 0 : index
      %17 = vector.load %arg6[%c0_8, %c0_9] : memref<64x128xbf16, #tpu.memory_space<vmem>>, vector<64x128xbf16>
      %c0_10 = arith.constant 0 : index
      %c0_11 = arith.constant 0 : index
      %18 = vector.load %arg7[%c0_10, %c0_11] : memref<128x128xbf16, #tpu.memory_space<vmem>>, vector<128x128xbf16>
      %cst = arith.constant dense<0.000000e+00> : vector<64x128xf32>
      %19 = tpu.matmul %17, %18, %cst {dimension_numbers = #tpu.dot_dimension_numbers<[1], [0], [0], [1], [0, 0, 1, 1], [], []>} : vector<64x128xbf16>, vector<128x128xbf16>, vector<64x128xf32> -> vector<64x128xf32>
      %20 = arith.addf %16, %19 : vector<64x128xf32>
      %c0_12 = arith.constant 0 : index
      %c0_13 = arith.constant 0 : index
      %21 = vector.load %arg8[%c0_12, %c0_13] : memref<1x128xf32, #tpu.memory_space<vmem>>, vector<1x128xf32>
      %22 = vector.broadcast %21 : vector<1x128xf32> to vector<64x128xf32>
      %23 = arith.addf %20, %22 : vector<64x128xf32>
      %c0_14 = arith.constant 0 : index
      %c0_15 = arith.constant 0 : index
      %24 = vector.load %arg10[%c0_14, %c0_15] : memref<64x128xf32, #tpu.memory_space<vmem>>, vector<64x128xf32>
      tpu.vector_store %arg10[%c0_14, %c0_15], %23 {strides = array<i32>} : memref<64x128xf32, #tpu.memory_space<vmem>>, vector<64x128xf32>,
    } else {
    }
    return
  }
  func.func @transform_0(%arg0: i32, %arg1: i32, %arg2: memref<2xi32, #tpu.memory_space<smem>>, %arg3: memref<2xi32, #tpu.memory_space<smem>>) -> (i32, i32) {
    %c1_i32 = arith.constant 1 : i32
    %0 = arith.muli %arg0, %c1_i32 : i32
    %1 = arith.addi %0, %arg1 : i32
    %2 = arith.index_cast %1 : i32 to index
    %3 = memref.load %arg3[%2] : memref<2xi32, #tpu.memory_space<smem>>
    %c0_i32 = arith.constant 0 : i32
    return %arg0, %3 : i32, i32
  }
  func.func @transform_1(%arg0: i32, %arg1: i32, %arg2: memref<2xi32, #tpu.memory_space<smem>>, %arg3: memref<2xi32, #tpu.memory_space<smem>>) -> (i32, i32) {
    %c1_i32 = arith.constant 1 : i32
    %0 = arith.muli %arg0, %c1_i32 : i32
    %1 = arith.addi %0, %arg1 : i32
    %2 = arith.index_cast %1 : i32 to index
    %3 = memref.load %arg3[%2] : memref<2xi32, #tpu.memory_space<smem>>
    %c0_i32 = arith.constant 0 : i32
    %c0_i32_0 = arith.constant 0 : i32
    return %3, %c0_i32 : i32, i32
  }
  func.func @transform_2(%arg0: i32, %arg1: i32, %arg2: memref<2xi32, #tpu.memory_space<smem>>, %arg3: memref<2xi32, #tpu.memory_space<smem>>) -> (i32, i32) {
    %c0_i32 = arith.constant 0 : i32
    %c0_i32_0 = arith.constant 0 : i32
    return %arg0, %c0_i32 : i32, i32
  }
  func.func @transform_3(%arg0: i32, %arg1: i32, %arg2: memref<2xi32, #tpu.memory_space<smem>>, %arg3: memref<2xi32, #tpu.memory_space<smem>>) -> (i32, i32) {
    %c0_i32 = arith.constant 0 : i32
    %c0_i32_0 = arith.constant 0 : i32
    %c0_i32_1 = arith.constant 0 : i32
    return %c0_i32, %c0_i32_0 : i32, i32
  }
  func.func @transform_4(%arg0: i32, %arg1: i32, %arg2: memref<2xi32, #tpu.memory_space<smem>>, %arg3: memref<2xi32, #tpu.memory_space<smem>>) -> (i32, i32) {
    %c0_i32 = arith.constant 0 : i32
    %c0_i32_0 = arith.constant 0 : i32
    %c0_i32_1 = arith.constant 0 : i32
    return %c0_i32, %c0_i32_0 : i32, i32
  }
  func.func @transform_5(%arg0: i32, %arg1: i32, %arg2: memref<2xi32, #tpu.memory_space<smem>>, %arg3: memref<2xi32, #tpu.memory_space<smem>>) -> (i32, i32) {
    %c0_i32 = arith.constant 0 : i32
    %c0_i32_0 = arith.constant 0 : i32
    return %arg0, %c0_i32 : i32, i32
  }
  func.func @transform_6(%arg0: i32, %arg1: i32, %arg2: memref<2xi32, #tpu.memory_space<smem>>, %arg3: memref<2xi32, #tpu.memory_space<smem>>) -> (i32, i32) {
    %c0_i32 = arith.constant 0 : i32
    %c0_i32_0 = arith.constant 0 : i32
    return %arg0, %c0_i32 : i32, i32
  }
}

</mosaic_0001>

<llo_original>
// kernel: gnn_forward.3
$region0: #{gnn_forward.3}
  #allocation0 [shape = 'u32[]', space=smem, size = 0x4, offset = 0x4, fixed_abs, tag = 'smem constant byte address 0x4 - core index']
  #allocation1 [shape = 'u32[144,128]{1,0:T(1,128)}', space=vmem, size = 0x12000, scoped, tag = 'internal scratch']
  #allocation2 [shape = 'f32[64,128]{1,0:T(8,128)}', space=vmem, size = 0x8000, scoped, tag = 'scratch operand']
  #allocation3 [shape = 's32[1]{0}', space=sflag, size = 0x4, scoped, tag = 'scoped memory for gnn_forward.3']
  #allocation4 [shape = 'u8[512]{0}', space=smem, size = 0x200, scoped, tag = 'prefetched SMEM operand 0']
  #allocation5 [shape = 'u8[512]{0}', space=smem, size = 0x200, scoped, tag = 'prefetched SMEM operand 1']
  %s0 = inlined_call_operand.vmem [shape: s32[2], index: 0, kind: input, shape index: {}]
  %s1 = inlined_call_operand.vmem [shape: s32[2], index: 1, kind: input, shape index: {}]
  %s2 = inlined_call_operand.vmem [shape: s8[128,128], index: 2, kind: input, shape index: {}]
  %s3 = inlined_call_operand.vmem [shape: bf16[128,128], index: 3, kind: input, shape index: {}]
  %s4 = inlined_call_operand.vmem [shape: bf16[128,128], index: 4, kind: input, shape index: {}]
  %s5 = inlined_call_operand.vmem [shape: bf16[128,128], index: 5, kind: input, shape index: {}]
  %s6 = inlined_call_operand.vmem [shape: f32[1,128], index: 6, kind: input, shape index: {}]
  %s7 = inlined_call_operand.vmem [shape: f32[128,1], index: 7, kind: input, shape index: {}]
  %s8 = inlined_call_operand.vmem [shape: f32[128,128], index: 8, kind: output, shape index: {}]
  %s9 = sld [smem:[#allocation0]]
  $region69: #{gnn_forward.3} parent=0
    _
  %s11 = ssub.s32 1, %s9
  %s12 = scalar_select 0, %s11, %s9
  %s13 = sshll.u32 %s0, 4
  %s14 = int_to_ptr.vmem [resolvable:$true] %s13
  %16 = dma.vmem_to_smem %s14, 16, [#allocation4], [#allocation3]
  %s17 = sshll.u32 %s1, 4
  %s18 = int_to_ptr.vmem [resolvable:$true] %s17
  %20 = dma.vmem_to_smem %s18, 16, [#allocation5], [#allocation3]
  %21 = dma.done [#allocation3], 32
  %22 = sfence
  loop: start=0, step=1, limit=4
  $region2: #{gnn_forward.3} parent=0 // loop_pre_header
    _
  $region3: #{gnn_forward.3} parent=0 // loop_header
    %s24 = sphi 0, %s28
    %p25 = scmp.ge.s32.totalorder %s24, 4
    %s31 = sphi 0, %s43
    %s32 = sphi 0, %s39
    %s33 = sphi 0, %s31
    %s34 = sphi 0, %s32
    %s35 = sphi 0, %s33
    %s36 = sphi 0, %s34
    %s52 = sphi 0, %s54
    %s55 = sphi 0, %s52
    %s56 = sphi 0, %s55
    %s72 = sphi 0, %s56
    %s82 = sphi 0, %s84
    %s85 = sphi 0, %s82
    %s86 = sphi 0, %s85
    %s102 = sphi 0, %s86
    %s108 = sphi 0, %s110
    %s111 = sphi 0, %s108
    %s112 = sphi 0, %s111
    %s128 = sphi 0, %s112
    %s132 = sphi 0, %s132
    %s134 = sphi 0, %s132
    %s135 = sphi 0, %s134
    %s149 = sphi 0, %s135
    %s153 = sphi 0, %s153
    %s155 = sphi 0, %s153
    %s156 = sphi 0, %s155
    %s170 = sphi 0, %s156
    %s176 = sphi 0, %s178
    %s179 = sphi 0, %s176
    %s180 = sphi 0, %s179
    %s196 = sphi 0, %s180
    %s202 = sphi 0, %s204
    %s205 = sphi 0, %s202
    %s206 = sphi 0, %s205
    %s222 = sphi 0, %s206
  $region4: #{gnn_forward.3} parent=0 // loop_header_branch
    %27 = sbr.rel (%p25) target = $region8
  $region5: #{gnn_forward.3} parent=0 // loop_body
    %s29 = ssub.s32 %s24, 1
    %s30 = ssub.s32 %s24, 2
    %s37 = sadd.s32 1, %s32
    %p38 = scmp.ge.s32.totalorder %s37, 1
    %s39 = scalar_select %p38, 0, %s37
    %s40 = sadd.s32 1, %s31
    %s41 = scalar_select %p38, %s40, %s31
    %p42 = scmp.ge.s32.totalorder %s41, 2
    %s43 = scalar_select %p42, 0, %s41
    %s44 = sadd.s32 %s31, %s32
    %s45 = sld [smem:[#allocation5 + %s44]]
    %s46 = sadd.s32 %s43, %s39
    %s47 = sld [smem:[#allocation5 + %s46]]
    %s48 = ssub.s32 %s31, %s43
    %s49 = ssub.s32 %s45, %s47
    %s50 = sor.u32 %s48, %s49
    %p51 = scmp.eq.s32.totalorder %s50, 0
    %s53 = sadd.s32 %s52, 1
    %s54 = scalar_select %p51, %s52, %s53
    %p57 = pneg %p51
    %p58 = scmp.eq.s32.totalorder %s24, 1
    %p59 = por %p57, %p58
    %p60 = scmp.ne.s32.totalorder %s52, %s55
    %p61 = scmp.eq.s32.totalorder %s24, 0
    %p62 = por %p60, %p61
    %p63 = scmp.ne.s32.totalorder %s52, %s55
    %p64 = scmp.eq.s32.totalorder %s29, 1
    %p65 = por %p63, %p64
    %p66 = scmp.ne.s32.totalorder %s55, %s56
    %p67 = scmp.eq.s32.totalorder %s29, 0
    %p68 = por %p66, %p67
    %p69 = scmp.ne.s32.totalorder %s55, %s56
    %p70 = scmp.eq.s32.totalorder %s30, 1
    %p71 = por %p69, %p70
    %p73 = scmp.ne.s32.totalorder %s56, %s72
    %p74 = scmp.eq.s32.totalorder %s30, 0
    %p75 = por %p73, %p74
    %s76 = sadd.s32 %s31, %s32
    %s77 = sld [smem:[#allocation5 + %s76]]
    %s78 = sadd.s32 %s43, %s39
    %s79 = sld [smem:[#allocation5 + %s78]]
    %s80 = ssub.s32 %s77, %s79
    %p81 = scmp.eq.s32.totalorder %s80, 0
    %s83 = sadd.s32 %s82, 1
    %s84 = scalar_select %p81, %s82, %s83
    %p87 = pneg %p81
    %p88 = scmp.eq.s32.totalorder %s24, 1
    %p89 = por %p87, %p88
    %p90 = scmp.ne.s32.totalorder %s82, %s85
    %p91 = scmp.eq.s32.totalorder %s24, 0
    %p92 = por %p90, %p91
    %p93 = scmp.ne.s32.totalorder %s82, %s85
    %p94 = scmp.eq.s32.totalorder %s29, 1
    %p95 = por %p93, %p94
    %p96 = scmp.ne.s32.totalorder %s85, %s86
    %p97 = scmp.eq.s32.totalorder %s29, 0
    %p98 = por %p96, %p97
    %p99 = scmp.ne.s32.totalorder %s85, %s86
    %p100 = scmp.eq.s32.totalorder %s30, 1
    %p101 = por %p99, %p100
    %p103 = scmp.ne.s32.totalorder %s86, %s102
    %p104 = scmp.eq.s32.totalorder %s30, 0
    %p105 = por %p103, %p104
    %s106 = ssub.s32 %s31, %s43
    %p107 = scmp.eq.s32.totalorder %s106, 0
    %s109 = sadd.s32 %s108, 1
    %s110 = scalar_select %p107, %s108, %s109
    %p113 = pneg %p107
    %p114 = scmp.eq.s32.totalorder %s24, 1
    %p115 = por %p113, %p114
    %p116 = scmp.ne.s32.totalorder %s108, %s111
    %p117 = scmp.eq.s32.totalorder %s24, 0
    %p118 = por %p116, %p117
    %p119 = scmp.ne.s32.totalorder %s108, %s111
    %p120 = scmp.eq.s32.totalorder %s29, 1
    %p121 = por %p119, %p120
    %p122 = scmp.ne.s32.totalorder %s111, %s112
    %p123 = scmp.eq.s32.totalorder %s29, 0
    %p124 = por %p122, %p123
    %p125 = scmp.ne.s32.totalorder %s111, %s112
    %p126 = scmp.eq.s32.totalorder %s30, 1
    %p127 = por %p125, %p126
    %p129 = scmp.ne.s32.totalorder %s112, %s128
    %p130 = scmp.eq.s32.totalorder %s30, 0
    %p131 = por %p129, %p130
    %s133 = sadd.s32 %s132, 1
    %p136 = scmp.eq.s32.totalorder %s24, 1
    %p137 = scmp.ne.s32.totalorder %s132, %s134
    %p138 = scmp.eq.s32.totalorder %s24, 0
    %p139 = por %p137, %p138
    %p140 = scmp.ne.s32.totalorder %s132, %s134
    %p141 = scmp.eq.s32.totalorder %s29, 1
    %p142 = por %p140, %p141
    %p143 = scmp.ne.s32.totalorder %s134, %s135
    %p144 = scmp.eq.s32.totalorder %s29, 0
    %p145 = por %p143, %p144
    %p146 = scmp.ne.s32.totalorder %s134, %s135
    %p147 = scmp.eq.s32.totalorder %s30, 1
    %p148 = por %p146, %p147
    %p150 = scmp.ne.s32.totalorder %s135, %s149
    %p151 = scmp.eq.s32.totalorder %s30, 0
    %p152 = por %p150, %p151
    %s154 = sadd.s32 %s153, 1
    %p157 = scmp.eq.s32.totalorder %s24, 1
    %p158 = scmp.ne.s32.totalorder %s153, %s155
    %p159 = scmp.eq.s32.totalorder %s24, 0
    %p160 = por %p158, %p159
    %p161 = scmp.ne.s32.totalorder %s153, %s155
    %p162 = scmp.eq.s32.totalorder %s29, 1
    %p163 = por %p161, %p162
    %p164 = scmp.ne.s32.totalorder %s155, %s156
    %p165 = scmp.eq.s32.totalorder %s29, 0
    %p166 = por %p164, %p165
    %p167 = scmp.ne.s32.totalorder %s155, %s156
    %p168 = scmp.eq.s32.totalorder %s30, 1
    %p169 = por %p167, %p168
    %p171 = scmp.ne.s32.totalorder %s156, %s170
    %p172 = scmp.eq.s32.totalorder %s30, 0
    %p173 = por %p171, %p172
    %s174 = ssub.s32 %s31, %s43
    %p175 = scmp.eq.s32.totalorder %s174, 0
    %s177 = sadd.s32 %s176, 1
    %s178 = scalar_select %p175, %s176, %s177
    %p181 = pneg %p175
    %p182 = scmp.eq.s32.totalorder %s24, 1
    %p183 = por %p181, %p182
    %p184 = scmp.ne.s32.totalorder %s176, %s179
    %p185 = scmp.eq.s32.totalorder %s24, 0
    %p186 = por %p184, %p185
    %p187 = scmp.ne.s32.totalorder %s176, %s179
    %p188 = scmp.eq.s32.totalorder %s29, 1
    %p189 = por %p187, %p188
    %p190 = scmp.ne.s32.totalorder %s179, %s180
    %p191 = scmp.eq.s32.totalorder %s29, 0
    %p192 = por %p190, %p191
    %p193 = scmp.ne.s32.totalorder %s179, %s180
    %p194 = scmp.eq.s32.totalorder %s30, 1
    %p195 = por %p193, %p194
    %p197 = scmp.ne.s32.totalorder %s180, %s196
    %p198 = scmp.eq.s32.totalorder %s30, 0
    %p199 = por %p197, %p198
    %s200 = ssub.s32 %s31, %s43
    %p201 = scmp.eq.s32.totalorder %s200, 0
    %s203 = sadd.s32 %s202, 1
    %s204 = scalar_select %p201, %s202, %s203
    %p207 = pneg %p201
    %p208 = scmp.eq.s32.totalorder %s24, 1
    %p209 = por %p207, %p208
    %p210 = scmp.ne.s32.totalorder %s202, %s205
    %p211 = scmp.eq.s32.totalorder %s24, 0
    %p212 = por %p210, %p211
    %p213 = scmp.ne.s32.totalorder %s202, %s205
    %p214 = scmp.eq.s32.totalorder %s29, 1
    %p215 = por %p213, %p214
    %p216 = scmp.ne.s32.totalorder %s205, %s206
    %p217 = scmp.eq.s32.totalorder %s29, 0
    %p218 = por %p216, %p217
    %p219 = scmp.ne.s32.totalorder %s205, %s206
    %p220 = scmp.eq.s32.totalorder %s30, 1
    %p221 = por %p219, %p220
    %p223 = scmp.ne.s32.totalorder %s206, %s222
    %p224 = scmp.eq.s32.totalorder %s30, 0
    %p225 = por %p223, %p224
    %p226 = scmp.le.s32.totalorder 1, %s24
    %p227 = scmp.lt.s32.totalorder %s24, 3
    %p228 = pnand %p226, %p227
    %p229 = pneg %p228
    // Predicated region
    $region9: #{gnn_forward.3} parent=5 // pred_check
      _
    $region10: #{gnn_forward.3} parent=5 // pred_check_branch
      %231 = sbr.rel (%p228) target = $region12
    $region11: #{gnn_forward.3} parent=5 // pred_region
      %s232 = ssub.s32 %s24, 1
      // Predicated region
      $region13: #{gnn_forward.3} parent=11 // pred_check
        %p233 = pneg %p145
      $region14: #{gnn_forward.3} parent=11 // pred_check_branch
        %235 = sbr.rel (%p233) target = $region16
      $region15: #{gnn_forward.3} parent=11 // pred_region
        _
      $region16: #{gnn_forward.3} parent=11 // pred_fallthru
        _
      // Predicated region
      $region17: #{gnn_forward.3} parent=11 // pred_check
        %p236 = pneg %p166
      $region18: #{gnn_forward.3} parent=11 // pred_check_branch
        %238 = sbr.rel (%p236) target = $region20
      $region19: #{gnn_forward.3} parent=11 // pred_region
        _
      $region20: #{gnn_forward.3} parent=11 // pred_fallthru
        _
    $region12: #{gnn_forward.3} parent=5 // pred_fallthru
      _
    %p239 = scmp.lt.s32.totalorder %s24, 2
    // Predicated region
    $region21: #{gnn_forward.3} parent=5 // pred_check
      %p240 = pneg %p239
    $region22: #{gnn_forward.3} parent=5 // pred_check_branch
      %242 = sbr.rel (%p240) target = $region24
    $region23: #{gnn_forward.3} parent=5 // pred_region
      // Predicated region
      $region25: #{gnn_forward.3} parent=23 // pred_check
        %p243 = pneg %p62
      $region26: #{gnn_forward.3} parent=23 // pred_check_branch
        %245 = sbr.rel (%p243) target = $region28
      $region27: #{gnn_forward.3} parent=23 // pred_region
        %s246 = sadd.s32 %s31, %s32
        %s247 = sld [smem:[#allocation5 + %s246]]
        %s248 = smul.u32 8, %s31
        %p249 = scmp.lt.s32.totalorder %s248, 15
        %s250 = scalar_select %p249, %s248, 15
        %p251 = scmp.lt.s32.totalorder %s247, 0
        %s252 = scalar_select %p251, %s247, 0
        %s253 = sadd.s32 %s252, %s250
        %s254 = smul.addr %s253, 2
        %s255 = scalar_lea.vmem %s2, %s254
        %s256 = sadd.s32 %s31, %s32
        %s257 = sld [smem:[#allocation5 + %s256]]
        %s258 = smul.u32 8, %s31
      $region28: #{gnn_forward.3} parent=23 // pred_fallthru
        _
      // Predicated region
      $region29: #{gnn_forward.3} parent=23 // pred_check
        %p259 = pneg %p92
      $region30: #{gnn_forward.3} parent=23 // pred_check_branch
        %261 = sbr.rel (%p259) target = $region32
      $region31: #{gnn_forward.3} parent=23 // pred_region
        %s262 = sadd.s32 %s31, %s32
        %s263 = sld [smem:[#allocation5 + %s262]]
        %s264 = smul.u32 16, %s263
        %p265 = scmp.lt.s32.totalorder %s264, 15
        %s266 = scalar_select %p265, %s264, 15
        %s267 = smul.addr %s266, 4
        %s268 = scalar_lea.vmem %s3, %s267
        %s269 = sadd.s32 %s31, %s32
        %s270 = sld [smem:[#allocation5 + %s269]]
        %s271 = smul.u32 16, %s270
      $region32: #{gnn_forward.3} parent=23 // pred_fallthru
        _
      // Predicated region
      $region33: #{gnn_forward.3} parent=23 // pred_check
        %p272 = pneg %p118
      $region34: #{gnn_forward.3} parent=23 // pred_check_branch
        %274 = sbr.rel (%p272) target = $region36
      $region35: #{gnn_forward.3} parent=23 // pred_region
        %s275 = smul.u32 8, %s31
        %p276 = scmp.lt.s32.totalorder %s275, 15
        %s277 = scalar_select %p276, %s275, 15
        %s278 = smul.addr %s277, 4
        %s279 = scalar_lea.vmem %s4, %s278
        %s280 = smul.u32 8, %s31
      $region36: #{gnn_forward.3} parent=23 // pred_fallthru
        _
      // Predicated region
      $region37: #{gnn_forward.3} parent=23 // pred_check
        %p281 = pneg %p186
      $region38: #{gnn_forward.3} parent=23 // pred_check_branch
        %283 = sbr.rel (%p281) target = $region40
      $region39: #{gnn_forward.3} parent=23 // pred_region
        %s284 = smul.u32 8, %s31
        %p285 = scmp.lt.s32.totalorder %s284, 15
        %s286 = scalar_select %p285, %s284, 15
        %s287 = smul.addr %s286, 8
        %s288 = scalar_lea.vmem %s7, %s287
        %s289 = smul.u32 8, %s31
      $region40: #{gnn_forward.3} parent=23 // pred_fallthru
        _
    $region24: #{gnn_forward.3} parent=5 // pred_fallthru
      _
    %p290 = scmp.le.s32.totalorder 1, %s24
    %p291 = scmp.lt.s32.totalorder %s24, 3
    %p292 = pnand %p290, %p291
    %p293 = pneg %p292
    // Predicated region
    $region41: #{gnn_forward.3} parent=5 // pred_check
      _
    $region42: #{gnn_forward.3} parent=5 // pred_check_branch
      %295 = sbr.rel (%p292) target = $region44
    $region43: #{gnn_forward.3} parent=5 // pred_region
      %s296 = ssub.s32 %s24, 1
      %s297 = sadd.s32 %s33, %s34
      %s298 = sld [smem:[#allocation5 + %s297]]
      %s299 = smul.u32 8, %s33
      %p300 = scmp.lt.s32.totalorder %s299, 15
      %s301 = scalar_select %p300, %s299, 15
      %p302 = scmp.lt.s32.totalorder %s298, 0
      %s303 = scalar_select %p302, %s298, 0
      %s304 = sadd.s32 %s303, %s301
      %s305 = smul.addr %s304, 2
      %s306 = scalar_lea.vmem %s2, %s305
      %p307 = pneg %p68
      %p308 = pneg %p65
      %s309 = sadd.s32 %s33, %s34
      %s310 = sld [smem:[#allocation5 + %s309]]
      %s311 = smul.u32 16, %s310
      %p312 = scmp.lt.s32.totalorder %s311, 15
      %s313 = scalar_select %p312, %s311, 15
      %s314 = smul.addr %s313, 4
      %s315 = scalar_lea.vmem %s3, %s314
      %p316 = pneg %p98
      %p317 = pneg %p95
      %s318 = smul.u32 8, %s33
      %p319 = scmp.lt.s32.totalorder %s318, 15
      %s320 = scalar_select %p319, %s318, 15
      %s321 = smul.addr %s320, 4
      %s322 = scalar_lea.vmem %s4, %s321
      %p323 = pneg %p124
      %p324 = pneg %p121
      %p325 = pneg %p145
      %p326 = pneg %p142
      %p327 = pneg %p166
      %p328 = pneg %p163
      %s329 = smul.u32 8, %s33
      %p330 = scmp.lt.s32.totalorder %s329, 15
      %s331 = scalar_select %p330, %s329, 15
      %s332 = smul.addr %s331, 8
      %s333 = scalar_lea.vmem %s7, %s332
      %p334 = pneg %p192
      %p335 = pneg %p189
      %p336 = pneg %p218
      %p337 = pneg %p215
      %s338 = smul.u32 8, %s33
      %p339 = scmp.lt.s32.totalorder %s338, 15
      %s340 = scalar_select %p339, %s338, 15
      %s341 = smul.addr %s340, 8
      %s342 = scalar_lea.vmem %s8, %s341
      %s343 = sadd.s32 %s33, %s34
      %s344 = sld [smem:[#allocation5 + %s343]]
      %s345 = smul.u32 8, %s33
      %p346 = scmp.lt.s32.totalorder %s345, 15
      %s347 = scalar_select %p346, %s345, 15
      %p348 = scmp.lt.s32.totalorder %s344, 0
      %s349 = scalar_select %p348, %s344, 0
      %s350 = sadd.s32 %s349, %s347
      %s351 = smul.addr %s350, 2
      %s352 = scalar_lea.vmem %s2, %s351
      %s353 = sadd.s32 %s33, %s34
      %s354 = sld [smem:[#allocation5 + %s353]]
      %s355 = smul.u32 8, %s33
      %s356 = sadd.s32 %s33, %s34
      %s357 = sld [smem:[#allocation5 + %s356]]
      %s358 = smul.u32 16, %s357
      %p359 = scmp.lt.s32.totalorder %s358, 15
      %s360 = scalar_select %p359, %s358, 15
      %s361 = smul.addr %s360, 4
      %s362 = scalar_lea.vmem %s3, %s361
      %s363 = sadd.s32 %s33, %s34
      %s364 = sld [smem:[#allocation5 + %s363]]
      %s365 = smul.u32 16, %s364
      %s366 = smul.u32 8, %s33
      %p367 = scmp.lt.s32.totalorder %s366, 15
      %s368 = scalar_select %p367, %s366, 15
      %s369 = smul.addr %s368, 4
      %s370 = scalar_lea.vmem %s4, %s369
      %s371 = smul.u32 8, %s33
      %s372 = smul.u32 8, %s33
      %p373 = scmp.lt.s32.totalorder %s372, 15
      %s374 = scalar_select %p373, %s372, 15
      %s375 = smul.addr %s374, 8
      %s376 = scalar_lea.vmem %s7, %s375
      %s377 = smul.u32 8, %s33
      %s378 = smul.u32 8, %s33
      %p379 = scmp.lt.s32.totalorder %s378, 15
      %s380 = scalar_select %p379, %s378, 15
      %s381 = smul.addr %s380, 8
      %s382 = scalar_lea.vmem %s8, %s381
      %s383 = smul.u32 8, %s33
      %p385 = scmp.eq.s32.totalorder %s34, 0
      // Predicated region
      $region45: #{gnn_forward.3} parent=43 // pred_check
        %p386 = pneg %p385
      $region46: #{gnn_forward.3} parent=43 // pred_check_branch
        %388 = sbr.rel (%p386) target = $region48
      $region47: #{gnn_forward.3} parent=43 // pred_region
        %389 = vst [vmem:[#allocation2] sm:$0xff] 0.0
        %390 = vst [vmem:[#allocation2 + $0x8] sm:$0xff] 0.0
        %391 = vst [vmem:[#allocation2 + $0x10] sm:$0xff] 0.0
        %392 = vst [vmem:[#allocation2 + $0x18] sm:$0xff] 0.0
        %393 = vst [vmem:[#allocation2 + $0x20] sm:$0xff] 0.0
        %394 = vst [vmem:[#allocation2 + $0x28] sm:$0xff] 0.0
        %395 = vst [vmem:[#allocation2 + $0x30] sm:$0xff] 0.0
        %396 = vst [vmem:[#allocation2 + $0x38] sm:$0xff] 0.0
      $region48: #{gnn_forward.3} parent=43 // pred_fallthru
        _
      %s397 = sadd.s32 %s33, %s34
      %s398 = sld [smem:[#allocation4 + %s397]]
      %p399 = scmp.gt.s32.totalorder %s398, 0
      // Predicated region
      $region49: #{gnn_forward.3} parent=43 // pred_check
        %p400 = pneg %p399
      $region50: #{gnn_forward.3} parent=43 // pred_check_branch
        %402 = sbr.rel (%p400) target = $region52
      $region51: #{gnn_forward.3} parent=43 // pred_region
        %v403 = vld [vmem:[%s352] sm:$0x3]
        %v404 = vld [vmem:[%s352 + $0x2] sm:$0x3]
        %v405 = vld [vmem:[%s352 + $0x4] sm:$0x3]
        %v406 = vld [vmem:[%s352 + $0x6] sm:$0x3]
        %v407 = vld [vmem:[%s352 + $0x8] sm:$0x3]
        %v408 = vld [vmem:[%s352 + $0xa] sm:$0x3]
        %v409 = vld [vmem:[%s352 + $0xc] sm:$0x3]
        %v410 = vld [vmem:[%s352 + $0xe] sm:$0x3]
        %v411 = vunpack.c.l.s8.bf16 %v403
        %v412 = vunpack.c.l.s8.bf16 %v404
        %v413 = vunpack.c.l.s8.bf16 %v405
        %v414 = vunpack.c.l.s8.bf16 %v406
        %v415 = vunpack.c.l.s8.bf16 %v407
        %v416 = vunpack.c.l.s8.bf16 %v408
        %v417 = vunpack.c.l.s8.bf16 %v409
        %v418 = vunpack.c.l.s8.bf16 %v410
        %v419 = vld [vmem:[#allocation2] sm:$0xff]
        %v420 = vld [vmem:[#allocation2 + $0x8] sm:$0xff]
        %v421 = vld [vmem:[#allocation2 + $0x10] sm:$0xff]
        %v422 = vld [vmem:[#allocation2 + $0x18] sm:$0xff]
        %v423 = vld [vmem:[#allocation2 + $0x20] sm:$0xff]
        %v424 = vld [vmem:[#allocation2 + $0x28] sm:$0xff]
        %v425 = vld [vmem:[#allocation2 + $0x30] sm:$0xff]
        %v426 = vld [vmem:[#allocation2 + $0x38] sm:$0xff]
        %v427 = vld [vmem:[%s362] sm:$0xf]
        %v428 = vld [vmem:[%s362 + $0x4] sm:$0xf]
        %v429 = vld [vmem:[%s362 + $0x8] sm:$0xf]
        %v430 = vld [vmem:[%s362 + $0xc] sm:$0xf]
        %v431 = vld [vmem:[%s362 + $0x10] sm:$0xf]
        %v432 = vld [vmem:[%s362 + $0x14] sm:$0xf]
        %v433 = vld [vmem:[%s362 + $0x18] sm:$0xf]
        %v434 = vld [vmem:[%s362 + $0x1c] sm:$0xf]
        %v435 = vld [vmem:[%s362 + $0x20] sm:$0xf]
        %v436 = vld [vmem:[%s362 + $0x24] sm:$0xf]
        %v437 = vld [vmem:[%s362 + $0x28] sm:$0xf]
        %v438 = vld [vmem:[%s362 + $0x2c] sm:$0xf]
        %v439 = vld [vmem:[%s362 + $0x30] sm:$0xf]
        %v440 = vld [vmem:[%s362 + $0x34] sm:$0xf]
        %v441 = vld [vmem:[%s362 + $0x38] sm:$0xf]
        %v442 = vld [vmem:[%s362 + $0x3c] sm:$0xf]
        %v451 = vunpack.c.l.b16 %v411
        %v452 = vunpack.c.l.b16 %v412
        %v453 = vunpack.c.l.b16 %v413
        %v454 = vunpack.c.l.b16 %v414
        %v455 = vunpack.c.l.b16 %v415
        %v456 = vunpack.c.l.b16 %v416
        %v457 = vunpack.c.l.b16 %v417
        %v458 = vunpack.c.l.b16 %v418
        %v459 = vpack.c.b16 %v452, %v451
        %v460 = vpack.c.b16 %v454, %v453
        %v461 = vpack.c.b16 %v456, %v455
        %v462 = vpack.c.b16 %v458, %v457
        %v483 = vunpack.c.l.b16 %v427
        %v484 = vunpack.c.l.b16 %v428
        %v485 = vunpack.c.l.b16 %v429
        %v486 = vunpack.c.l.b16 %v430
        %v487 = vunpack.c.l.b16 %v431
        %v488 = vunpack.c.l.b16 %v432
        %v489 = vunpack.c.l.b16 %v433
        %v490 = vunpack.c.l.b16 %v434
        %v491 = vunpack.c.l.b16 %v435
        %v492 = vunpack.c.l.b16 %v436
        %v493 = vunpack.c.l.b16 %v437
        %v494 = vunpack.c.l.b16 %v438
        %v495 = vunpack.c.l.b16 %v439
        %v496 = vunpack.c.l.b16 %v440
        %v497 = vunpack.c.l.b16 %v441
        %v498 = vunpack.c.l.b16 %v442
        %v499 = vpack.c.b16 %v484, %v483
        %v500 = vpack.c.b16 %v486, %v485
        %v501 = vpack.c.b16 %v488, %v487
        %v502 = vpack.c.b16 %v490, %v489
        %v503 = vpack.c.b16 %v492, %v491
        %v504 = vpack.c.b16 %v494, %v493
        %v505 = vpack.c.b16 %v496, %v495
        %v506 = vpack.c.b16 %v498, %v497
        %515 = vmatprep.subr.bf16.mxu0 0
        %516 = vmatpush1.bf16.msra.mxu0 %v499
        %517 = vmatprep.subr.bf16.mxu0 0
        %518 = vmatpush1.bf16.msra.mxu0 %v500
        %519 = vmatprep.subr.bf16.mxu0 0
        %520 = vmatpush1.bf16.msra.mxu0 %v501
        %521 = vmatprep.subr.bf16.mxu0 0
        %522 = vmatpush1.bf16.msra.mxu0 %v502
        %523 = vmatprep.subr.bf16.mxu0 0
        %524 = vmatpush1.bf16.msra.mxu0 %v503
        %525 = vmatprep.subr.bf16.mxu0 0
        %526 = vmatpush1.bf16.msra.mxu0 %v504
        %527 = vmatprep.subr.bf16.mxu0 0
        %528 = vmatpush1.bf16.msra.mxu0 %v505
        %529 = vmatprep.subr.bf16.mxu0 0
        %530 = vmatpush1.bf16.msra.mxu0 %v506
        %531 = vmatprep.subr.bf16.mxu0 0
        %532 = vmatpush1.bf16.msra.mxu0 0
        %533 = vmatprep.subr.bf16.mxu0 0
        %534 = vmatpush1.bf16.msra.mxu0 0
        %535 = vmatprep.subr.bf16.mxu0 0
        %536 = vmatpush1.bf16.msra.mxu0 0
        %537 = vmatprep.subr.bf16.mxu0 0
        %538 = vmatpush1.bf16.msra.mxu0 0
        %539 = vmatprep.subr.bf16.mxu0 0
        %540 = vmatpush1.bf16.msra.mxu0 0
        %541 = vmatprep.subr.bf16.mxu0 0
        %542 = vmatpush1.bf16.msra.mxu0 0
        %543 = vmatprep.subr.bf16.mxu0 0
        %544 = vmatpush1.bf16.msra.mxu0 0
        %545 = vmatprep.subr.bf16.mxu0 0
        %546 = vmatpush1.bf16.msra.mxu0 0
        %547 = vmatprep.mubr.bf16.mxu0 0
        %548 = vmatmul.mubr.bf16.gmra.mrb[0].mxu0 %v459
        %v549 = vpop.f32.mrb[0].mxu0
        %v550 = vadd.f32 0.0, %v549
        %v551 = vpop.f32.mrb[0].mxu0
        %v552 = vpop.f32.mrb[0].mxu0
        %v553 = vadd.f32 0.0, %v552
        %v554 = vpop.f32.mrb[0].mxu0
        %555 = vmatprep.mubr.bf16.mxu0 0
        %556 = vmatmul.mubr.bf16.gmra.mrb[0].mxu0 %v460
        %v557 = vpop.f32.mrb[0].mxu0
        %v558 = vadd.f32 0.0, %v557
        %v559 = vpop.f32.mrb[0].mxu0
        %v560 = vpop.f32.mrb[0].mxu0
        %v561 = vadd.f32 0.0, %v560
        %v562 = vpop.f32.mrb[0].mxu0
        %563 = vmatprep.mubr.bf16.mxu0 0
        %564 = vmatmul.mubr.bf16.gmra.mrb[0].mxu0 %v461
        %v565 = vpop.f32.mrb[0].mxu0
        %v566 = vadd.f32 0.0, %v565
        %v567 = vpop.f32.mrb[0].mxu0
        %v568 = vpop.f32.mrb[0].mxu0
        %v569 = vadd.f32 0.0, %v568
        %v570 = vpop.f32.mrb[0].mxu0
        %571 = vmatprep.mubr.bf16.mxu0 0
        %572 = vmatmul.mubr.bf16.gmra.mrb[0].mxu0 %v462
        %v573 = vpop.f32.mrb[0].mxu0
        %v574 = vadd.f32 0.0, %v573
        %v575 = vpop.f32.mrb[0].mxu0
        %v576 = vpop.f32.mrb[0].mxu0
        %v577 = vadd.f32 0.0, %v576
        %v578 = vpop.f32.mrb[0].mxu0
        %579 = vdwg.mxu0
        %v580 = vadd.f32 %v419, %v550
        %v581 = vadd.f32 %v420, %v553
        %v582 = vadd.f32 %v421, %v558
        %v583 = vadd.f32 %v422, %v561
        %v584 = vadd.f32 %v423, %v566
        %v585 = vadd.f32 %v424, %v569
        %v586 = vadd.f32 %v425, %v574
        %v587 = vadd.f32 %v426, %v577
        %588 = vst [vmem:[#allocation2] sm:$0xff] %v580
        %589 = vst [vmem:[#allocation2 + $0x8] sm:$0xff] %v581
        %590 = vst [vmem:[#allocation2 + $0x10] sm:$0xff] %v582
        %591 = vst [vmem:[#allocation2 + $0x18] sm:$0xff] %v583
        %592 = vst [vmem:[#allocation2 + $0x20] sm:$0xff] %v584
        %593 = vst [vmem:[#allocation2 + $0x28] sm:$0xff] %v585
        %594 = vst [vmem:[#allocation2 + $0x30] sm:$0xff] %v586
        %595 = vst [vmem:[#allocation2 + $0x38] sm:$0xff] %v587
      $region52: #{gnn_forward.3} parent=43 // pred_fallthru
        _
      // Predicated region
      $region53: #{gnn_forward.3} parent=43 // pred_check
        %p596 = pneg %p385
      $region54: #{gnn_forward.3} parent=43 // pred_check_branch
        %598 = sbr.rel (%p596) target = $region56
      $region55: #{gnn_forward.3} parent=43 // pred_region
        %v599 = vld [vmem:[#allocation2] sm:$0xff]
        %v600 = vld [vmem:[#allocation2 + $0x8] sm:$0xff]
        %v601 = vld [vmem:[#allocation2 + $0x10] sm:$0xff]
        %v602 = vld [vmem:[#allocation2 + $0x18] sm:$0xff]
        %v603 = vld [vmem:[#allocation2 + $0x20] sm:$0xff]
        %v604 = vld [vmem:[#allocation2 + $0x28] sm:$0xff]
        %v605 = vld [vmem:[#allocation2 + $0x30] sm:$0xff]
        %v606 = vld [vmem:[#allocation2 + $0x38] sm:$0xff]
        %v607 = vld [vmem:[%s376] sm:$0xff]
        %v608 = vld [vmem:[%s376 + $0x8] sm:$0xff]
        %v609 = vld [vmem:[%s376 + $0x10] sm:$0xff]
        %v610 = vld [vmem:[%s376 + $0x18] sm:$0xff]
        %v611 = vld [vmem:[%s376 + $0x20] sm:$0xff]
        %v612 = vld [vmem:[%s376 + $0x28] sm:$0xff]
        %v613 = vld [vmem:[%s376 + $0x30] sm:$0xff]
        %v614 = vld [vmem:[%s376 + $0x38] sm:$0xff]
        %616 = vset.pattern.permute.xlu0 0
        %617 = vperm.xlu0 %616, %v607
        %v618 = vpop.permute.xlu0 %617
        %621 = vset.pattern.permute.xlu0 0
        %622 = vperm.xlu0 %621, %v608
        %v623 = vpop.permute.xlu0 %622
        %626 = vset.pattern.permute.xlu0 0
        %627 = vperm.xlu0 %626, %v609
        %v628 = vpop.permute.xlu0 %627
        %631 = vset.pattern.permute.xlu0 0
        %632 = vperm.xlu0 %631, %v610
        %v633 = vpop.permute.xlu0 %632
        %636 = vset.pattern.permute.xlu0 0
        %637 = vperm.xlu0 %636, %v611
        %v638 = vpop.permute.xlu0 %637
        %641 = vset.pattern.permute.xlu0 0
        %642 = vperm.xlu0 %641, %v612
        %v643 = vpop.permute.xlu0 %642
        %646 = vset.pattern.permute.xlu0 0
        %647 = vperm.xlu0 %646, %v613
        %v648 = vpop.permute.xlu0 %647
        %651 = vset.pattern.permute.xlu0 0
        %652 = vperm.xlu0 %651, %v614
        %v653 = vpop.permute.xlu0 %652
        %v655 = vmul.f32 %v599, %v618
        %v656 = vmul.f32 %v600, %v623
        %v657 = vmul.f32 %v601, %v628
        %v658 = vmul.f32 %v602, %v633
        %v659 = vmul.f32 %v603, %v638
        %v660 = vmul.f32 %v604, %v643
        %v661 = vmul.f32 %v605, %v648
        %v662 = vmul.f32 %v606, %v653
        %v663 = vld [vmem:[%s370] sm:$0xf]
        %v664 = vld [vmem:[%s370 + $0x4] sm:$0xf]
        %v665 = vld [vmem:[%s370 + $0x8] sm:$0xf]
        %v666 = vld [vmem:[%s370 + $0xc] sm:$0xf]
        %v667 = vld [vmem:[%s370 + $0x10] sm:$0xf]
        %v668 = vld [vmem:[%s370 + $0x14] sm:$0xf]
        %v669 = vld [vmem:[%s370 + $0x18] sm:$0xf]
        %v670 = vld [vmem:[%s370 + $0x1c] sm:$0xf]
        %v671 = vld [vmem:[%s5] sm:$0xf]
        %v672 = vld [vmem:[%s5 + $0x4] sm:$0xf]
        %v673 = vld [vmem:[%s5 + $0x8] sm:$0xf]
        %v674 = vld [vmem:[%s5 + $0xc] sm:$0xf]
        %v675 = vld [vmem:[%s5 + $0x10] sm:$0xf]
        %v676 = vld [vmem:[%s5 + $0x14] sm:$0xf]
        %v677 = vld [vmem:[%s5 + $0x18] sm:$0xf]
        %v678 = vld [vmem:[%s5 + $0x1c] sm:$0xf]
        %v679 = vld [vmem:[%s5 + $0x20] sm:$0xf]
        %v680 = vld [vmem:[%s5 + $0x24] sm:$0xf]
        %v681 = vld [vmem:[%s5 + $0x28] sm:$0xf]
        %v682 = vld [vmem:[%s5 + $0x2c] sm:$0xf]
        %v683 = vld [vmem:[%s5 + $0x30] sm:$0xf]
        %v684 = vld [vmem:[%s5 + $0x34] sm:$0xf]
        %v685 = vld [vmem:[%s5 + $0x38] sm:$0xf]
        %v686 = vld [vmem:[%s5 + $0x3c] sm:$0xf]
        %v695 = vunpack.c.l.b16 %v663
        %v696 = vunpack.c.l.b16 %v664
        %v697 = vunpack.c.l.b16 %v665
        %v698 = vunpack.c.l.b16 %v666
        %v699 = vunpack.c.l.b16 %v667
        %v700 = vunpack.c.l.b16 %v668
        %v701 = vunpack.c.l.b16 %v669
        %v702 = vunpack.c.l.b16 %v670
        %v703 = vpack.c.b16 %v696, %v695
        %v704 = vpack.c.b16 %v698, %v697
        %v705 = vpack.c.b16 %v700, %v699
        %v706 = vpack.c.b16 %v702, %v701
        %v727 = vunpack.c.l.b16 %v671
        %v728 = vunpack.c.l.b16 %v672
        %v729 = vunpack.c.l.b16 %v673
        %v730 = vunpack.c.l.b16 %v674
        %v731 = vunpack.c.l.b16 %v675
        %v732 = vunpack.c.l.b16 %v676
        %v733 = vunpack.c.l.b16 %v677
        %v734 = vunpack.c.l.b16 %v678
        %v735 = vunpack.c.l.b16 %v679
        %v736 = vunpack.c.l.b16 %v680
        %v737 = vunpack.c.l.b16 %v681
        %v738 = vunpack.c.l.b16 %v682
        %v739 = vunpack.c.l.b16 %v683
        %v740 = vunpack.c.l.b16 %v684
        %v741 = vunpack.c.l.b16 %v685
        %v742 = vunpack.c.l.b16 %v686
        %v743 = vpack.c.b16 %v728, %v727
        %v744 = vpack.c.b16 %v730, %v729
        %v745 = vpack.c.b16 %v732, %v731
        %v746 = vpack.c.b16 %v734, %v733
        %v747 = vpack.c.b16 %v736, %v735
        %v748 = vpack.c.b16 %v738, %v737
        %v749 = vpack.c.b16 %v740, %v739
        %v750 = vpack.c.b16 %v742, %v741
        %759 = vmatprep.subr.bf16.mxu0 0
        %760 = vmatpush1.bf16.msra.mxu0 %v743
        %761 = vmatprep.subr.bf16.mxu0 0
        %762 = vmatpush1.bf16.msra.mxu0 %v744
        %763 = vmatprep.subr.bf16.mxu0 0
        %764 = vmatpush1.bf16.msra.mxu0 %v745
        %765 = vmatprep.subr.bf16.mxu0 0
        %766 = vmatpush1.bf16.msra.mxu0 %v746
        %767 = vmatprep.subr.bf16.mxu0 0
        %768 = vmatpush1.bf16.msra.mxu0 %v747
        %769 = vmatprep.subr.bf16.mxu0 0
        %770 = vmatpush1.bf16.msra.mxu0 %v748
        %771 = vmatprep.subr.bf16.mxu0 0
        %772 = vmatpush1.bf16.msra.mxu0 %v749
        %773 = vmatprep.subr.bf16.mxu0 0
        %774 = vmatpush1.bf16.msra.mxu0 %v750
        %775 = vmatprep.subr.bf16.mxu0 0
        %776 = vmatpush1.bf16.msra.mxu0 0
        %777 = vmatprep.subr.bf16.mxu0 0
        %778 = vmatpush1.bf16.msra.mxu0 0
        %779 = vmatprep.subr.bf16.mxu0 0
        %780 = vmatpush1.bf16.msra.mxu0 0
        %781 = vmatprep.subr.bf16.mxu0 0
        %782 = vmatpush1.bf16.msra.mxu0 0
        %783 = vmatprep.subr.bf16.mxu0 0
        %784 = vmatpush1.bf16.msra.mxu0 0
        %785 = vmatprep.subr.bf16.mxu0 0
        %786 = vmatpush1.bf16.msra.mxu0 0
        %787 = vmatprep.subr.bf16.mxu0 0
        %788 = vmatpush1.bf16.msra.mxu0 0
        %789 = vmatprep.subr.bf16.mxu0 0
        %790 = vmatpush1.bf16.msra.mxu0 0
        %791 = vmatprep.mubr.bf16.mxu0 0
        %792 = vmatmul.mubr.bf16.gmra.mrb[0].mxu0 %v703
        %v793 = vpop.f32.mrb[0].mxu0
        %v794 = vadd.f32 0.0, %v793
        %v795 = vpop.f32.mrb[0].mxu0
        %v796 = vpop.f32.mrb[0].mxu0
        %v797 = vadd.f32 0.0, %v796
        %v798 = vpop.f32.mrb[0].mxu0
        %799 = vmatprep.mubr.bf16.mxu0 0
        %800 = vmatmul.mubr.bf16.gmra.mrb[0].mxu0 %v704
        %v801 = vpop.f32.mrb[0].mxu0
        %v802 = vadd.f32 0.0, %v801
        %v803 = vpop.f32.mrb[0].mxu0
        %v804 = vpop.f32.mrb[0].mxu0
        %v805 = vadd.f32 0.0, %v804
        %v806 = vpop.f32.mrb[0].mxu0
        %807 = vmatprep.mubr.bf16.mxu0 0
        %808 = vmatmul.mubr.bf16.gmra.mrb[0].mxu0 %v705
        %v809 = vpop.f32.mrb[0].mxu0
        %v810 = vadd.f32 0.0, %v809
        %v811 = vpop.f32.mrb[0].mxu0
        %v812 = vpop.f32.mrb[0].mxu0
        %v813 = vadd.f32 0.0, %v812
        %v814 = vpop.f32.mrb[0].mxu0
        %815 = vmatprep.mubr.bf16.mxu0 0
        %816 = vmatmul.mubr.bf16.gmra.mrb[0].mxu0 %v706
        %v817 = vpop.f32.mrb[0].mxu0
        %v818 = vadd.f32 0.0, %v817
        %v819 = vpop.f32.mrb[0].mxu0
        %v820 = vpop.f32.mrb[0].mxu0
        %v821 = vadd.f32 0.0, %v820
        %v822 = vpop.f32.mrb[0].mxu0
        %823 = vdwg.mxu0
        %v824 = vadd.f32 %v655, %v794
        %v825 = vadd.f32 %v656, %v797
        %v826 = vadd.f32 %v657, %v802
        %v827 = vadd.f32 %v658, %v805
        %v828 = vadd.f32 %v659, %v810
        %v829 = vadd.f32 %v660, %v813
        %v830 = vadd.f32 %v661, %v818
        %v831 = vadd.f32 %v662, %v821
        %v832 = vld [vmem:[%s6] sm:$0x1]
        %v834 = vlaneseq
        %v835 = vshrl.u32 %v834, 7
        %v836 = vsub.s32 0, %v835
        %v837 = vrot.slane %v832, %v836
        %v839 = vadd.f32 %v824, %v837
        %v840 = vadd.f32 %v825, %v837
        %v841 = vadd.f32 %v826, %v837
        %v842 = vadd.f32 %v827, %v837
        %v843 = vadd.f32 %v828, %v837
        %v844 = vadd.f32 %v829, %v837
        %v845 = vadd.f32 %v830, %v837
        %v846 = vadd.f32 %v831, %v837
        %847 = vst [vmem:[%s382] sm:$0xff] %v839
        %848 = vst [vmem:[%s382 + $0x8] sm:$0xff] %v840
        %849 = vst [vmem:[%s382 + $0x10] sm:$0xff] %v841
        %850 = vst [vmem:[%s382 + $0x18] sm:$0xff] %v842
        %851 = vst [vmem:[%s382 + $0x20] sm:$0xff] %v843
        %852 = vst [vmem:[%s382 + $0x28] sm:$0xff] %v844
        %853 = vst [vmem:[%s382 + $0x30] sm:$0xff] %v845
        %854 = vst [vmem:[%s382 + $0x38] sm:$0xff] %v846
      $region56: #{gnn_forward.3} parent=43 // pred_fallthru
        _
      %s855 = smul.u32 8, %s33
      %p856 = scmp.lt.s32.totalorder %s855, 15
      %s857 = scalar_select %p856, %s855, 15
      %s858 = smul.addr %s857, 8
      %s859 = scalar_lea.vmem %s8, %s858
      // Predicated region
      $region57: #{gnn_forward.3} parent=43 // pred_check
        %p860 = pneg %p215
      $region58: #{gnn_forward.3} parent=43 // pred_check_branch
        %862 = sbr.rel (%p860) target = $region60
      $region59: #{gnn_forward.3} parent=43 // pred_region
        %s863 = smul.u32 8, %s33
      $region60: #{gnn_forward.3} parent=43 // pred_fallthru
        _
    $region44: #{gnn_forward.3} parent=5 // pred_fallthru
      _
    %p864 = scmp.le.s32.totalorder 2, %s24
    // Predicated region
    $region61: #{gnn_forward.3} parent=5 // pred_check
      %p865 = pneg %p864
    $region62: #{gnn_forward.3} parent=5 // pred_check_branch
      %867 = sbr.rel (%p865) target = $region64
    $region63: #{gnn_forward.3} parent=5 // pred_region
      %s868 = ssub.s32 %s24, 2
      // Predicated region
      $region65: #{gnn_forward.3} parent=63 // pred_check
        %p869 = pneg %p221
      $region66: #{gnn_forward.3} parent=63 // pred_check_branch
        %871 = sbr.rel (%p869) target = $region68
      $region67: #{gnn_forward.3} parent=63 // pred_region
        %s872 = smul.u32 8, %s35
        %p873 = scmp.lt.s32.totalorder %s872, 15
        %s874 = scalar_select %p873, %s872, 15
        %s875 = smul.addr %s874, 8
        %s876 = scalar_lea.vmem %s8, %s875
      $region68: #{gnn_forward.3} parent=63 // pred_fallthru
        _
    $region64: #{gnn_forward.3} parent=5 // pred_fallthru
      _
  $region6: #{gnn_forward.3} parent=0 // loop_footer
    %s28 = sadd.s32 1, %s24
  $region7: #{gnn_forward.3} parent=0 // loop_footer_branch
    %23 = sbr.rel target = $region3
  $region8: #{gnn_forward.3} parent=0 // loop_exit
    _

// kernel: gnn_forward.2
$region0: #{gnn_forward.2}
  #allocation0 [shape = 'u32[]', space=smem, size = 0x4, offset = 0x4, fixed_abs, tag = 'smem constant byte address 0x4 - core index']
  #allocation1 [shape = 'u32[144,128]{1,0:T(1,128)}', space=vmem, size = 0x12000, scoped, tag = 'internal scratch']
  #allocation2 [shape = 'f32[64,128]{1,0:T(8,128)}', space=vmem, size = 0x8000, scoped, tag = 'scratch operand']
  #allocation3 [shape = 's32[1]{0}', space=sflag, size = 0x4, scoped, tag = 'scoped memory for gnn_forward.2']
  #allocation4 [shape = 'u8[512]{0}', space=smem, size = 0x200, scoped, tag = 'prefetched SMEM operand 0']
  #allocation5 [shape = 'u8[512]{0}', space=smem, size = 0x200, scoped, tag = 'prefetched SMEM operand 1']
  %s0 = inlined_call_operand.vmem [shape: s32[2], index: 0, kind: input, shape index: {}]
  %s1 = inlined_call_operand.vmem [shape: s32[2], index: 1, kind: input, shape index: {}]
  %s2 = inlined_call_operand.vmem [shape: s8[128,128], index: 2, kind: input, shape index: {}]
  %s3 = inlined_call_operand.vmem [shape: bf16[128,128], index: 3, kind: input, shape index: {}]
  %s4 = inlined_call_operand.vmem [shape: bf16[128,128], index: 4, kind: input, shape index: {}]
  %s5 = inlined_call_operand.vmem [shape: bf16[128,128], index: 5, kind: input, shape index: {}]
  %s6 = inlined_call_operand.vmem [shape: f32[1,128], index: 6, kind: input, shape index: {}]
  %s7 = inlined_call_operand.vmem [shape: f32[128,1], index: 7, kind: input, shape index: {}]
  %s8 = inlined_call_operand.vmem [shape: bf16[128,128], index: 8, kind: output, shape index: {}]
  %s9 = sld [smem:[#allocation0]]
  $region69: #{gnn_forward.2} parent=0
    _
  %s11 = ssub.s32 1, %s9
  %s12 = scalar_select 0, %s11, %s9
  %s13 = sshll.u32 %s0, 4
  %s14 = int_to_ptr.vmem [resolvable:$true] %s13
  %16 = dma.vmem_to_smem %s14, 16, [#allocation4], [#allocation3]
  %s17 = sshll.u32 %s1, 4
  %s18 = int_to_ptr.vmem [resolvable:$true] %s17
  %20 = dma.vmem_to_smem %s18, 16, [#allocation5], [#allocation3]
  %21 = dma.done [#allocation3], 32
  %22 = sfence
  loop: start=0, step=1, limit=4
  $region2: #{gnn_forward.2} parent=0 // loop_pre_header
    _
  $region3: #{gnn_forward.2} parent=0 // loop_header
    %s24 = sphi 0, %s28
    %p25 = scmp.ge.s32.totalorder %s24, 4
    %s31 = sphi 0, %s43
    %s32 = sphi 0, %s39
    %s33 = sphi 0, %s31
    %s34 = sphi 0, %s32
    %s35 = sphi 0, %s33
    %s36 = sphi 0, %s34
    %s52 = sphi 0, %s54
    %s55 = sphi 0, %s52
    %s56 = sphi 0, %s55
    %s72 = sphi 0, %s56
    %s82 = sphi 0, %s84
    %s85 = sphi 0, %s82
    %s86 = sphi 0, %s85
    %s102 = sphi 0, %s86
    %s108 = sphi 0, %s110
    %s111 = sphi 0, %s108
    %s112 = sphi 0, %s111
    %s128 = sphi 0, %s112
    %s132 = sphi 0, %s132
    %s134 = sphi 0, %s132
    %s135 = sphi 0, %s134
    %s149 = sphi 0, %s135
    %s153 = sphi 0, %s153
    %s155 = sphi 0, %s153
    %s156 = sphi 0, %s155
    %s170 = sphi 0, %s156
    %s176 = sphi 0, %s178
    %s179 = sphi 0, %s176
    %s180 = sphi 0, %s179
    %s196 = sphi 0, %s180
    %s202 = sphi 0, %s204
    %s205 = sphi 0, %s202
    %s206 = sphi 0, %s205
    %s222 = sphi 0, %s206
  $region4: #{gnn_forward.2} parent=0 // loop_header_branch
    %27 = sbr.rel (%p25) target = $region8
  $region5: #{gnn_forward.2} parent=0 // loop_body
    %s29 = ssub.s32 %s24, 1
    %s30 = ssub.s32 %s24, 2
    %s37 = sadd.s32 1, %s32
    %p38 = scmp.ge.s32.totalorder %s37, 1
    %s39 = scalar_select %p38, 0, %s37
    %s40 = sadd.s32 1, %s31
    %s41 = scalar_select %p38, %s40, %s31
    %p42 = scmp.ge.s32.totalorder %s41, 2
    %s43 = scalar_select %p42, 0, %s41
    %s44 = sadd.s32 %s31, %s32
    %s45 = sld [smem:[#allocation5 + %s44]]
    %s46 = sadd.s32 %s43, %s39
    %s47 = sld [smem:[#allocation5 + %s46]]
    %s48 = ssub.s32 %s31, %s43
    %s49 = ssub.s32 %s45, %s47
    %s50 = sor.u32 %s48, %s49
    %p51 = scmp.eq.s32.totalorder %s50, 0
    %s53 = sadd.s32 %s52, 1
    %s54 = scalar_select %p51, %s52, %s53
    %p57 = pneg %p51
    %p58 = scmp.eq.s32.totalorder %s24, 1
    %p59 = por %p57, %p58
    %p60 = scmp.ne.s32.totalorder %s52, %s55
    %p61 = scmp.eq.s32.totalorder %s24, 0
    %p62 = por %p60, %p61
    %p63 = scmp.ne.s32.totalorder %s52, %s55
    %p64 = scmp.eq.s32.totalorder %s29, 1
    %p65 = por %p63, %p64
    %p66 = scmp.ne.s32.totalorder %s55, %s56
    %p67 = scmp.eq.s32.totalorder %s29, 0
    %p68 = por %p66, %p67
    %p69 = scmp.ne.s32.totalorder %s55, %s56
    %p70 = scmp.eq.s32.totalorder %s30, 1
    %p71 = por %p69, %p70
    %p73 = scmp.ne.s32.totalorder %s56, %s72
    %p74 = scmp.eq.s32.totalorder %s30, 0
    %p75 = por %p73, %p74
    %s76 = sadd.s32 %s31, %s32
    %s77 = sld [smem:[#allocation5 + %s76]]
    %s78 = sadd.s32 %s43, %s39
    %s79 = sld [smem:[#allocation5 + %s78]]
    %s80 = ssub.s32 %s77, %s79
    %p81 = scmp.eq.s32.totalorder %s80, 0
    %s83 = sadd.s32 %s82, 1
    %s84 = scalar_select %p81, %s82, %s83
    %p87 = pneg %p81
    %p88 = scmp.eq.s32.totalorder %s24, 1
    %p89 = por %p87, %p88
    %p90 = scmp.ne.s32.totalorder %s82, %s85
    %p91 = scmp.eq.s32.totalorder %s24, 0
    %p92 = por %p90, %p91
    %p93 = scmp.ne.s32.totalorder %s82, %s85
    %p94 = scmp.eq.s32.totalorder %s29, 1
    %p95 = por %p93, %p94
    %p96 = scmp.ne.s32.totalorder %s85, %s86
    %p97 = scmp.eq.s32.totalorder %s29, 0
    %p98 = por %p96, %p97
    %p99 = scmp.ne.s32.totalorder %s85, %s86
    %p100 = scmp.eq.s32.totalorder %s30, 1
    %p101 = por %p99, %p100
    %p103 = scmp.ne.s32.totalorder %s86, %s102
    %p104 = scmp.eq.s32.totalorder %s30, 0
    %p105 = por %p103, %p104
    %s106 = ssub.s32 %s31, %s43
    %p107 = scmp.eq.s32.totalorder %s106, 0
    %s109 = sadd.s32 %s108, 1
    %s110 = scalar_select %p107, %s108, %s109
    %p113 = pneg %p107
    %p114 = scmp.eq.s32.totalorder %s24, 1
    %p115 = por %p113, %p114
    %p116 = scmp.ne.s32.totalorder %s108, %s111
    %p117 = scmp.eq.s32.totalorder %s24, 0
    %p118 = por %p116, %p117
    %p119 = scmp.ne.s32.totalorder %s108, %s111
    %p120 = scmp.eq.s32.totalorder %s29, 1
    %p121 = por %p119, %p120
    %p122 = scmp.ne.s32.totalorder %s111, %s112
    %p123 = scmp.eq.s32.totalorder %s29, 0
    %p124 = por %p122, %p123
    %p125 = scmp.ne.s32.totalorder %s111, %s112
    %p126 = scmp.eq.s32.totalorder %s30, 1
    %p127 = por %p125, %p126
    %p129 = scmp.ne.s32.totalorder %s112, %s128
    %p130 = scmp.eq.s32.totalorder %s30, 0
    %p131 = por %p129, %p130
    %s133 = sadd.s32 %s132, 1
    %p136 = scmp.eq.s32.totalorder %s24, 1
    %p137 = scmp.ne.s32.totalorder %s132, %s134
    %p138 = scmp.eq.s32.totalorder %s24, 0
    %p139 = por %p137, %p138
    %p140 = scmp.ne.s32.totalorder %s132, %s134
    %p141 = scmp.eq.s32.totalorder %s29, 1
    %p142 = por %p140, %p141
    %p143 = scmp.ne.s32.totalorder %s134, %s135
    %p144 = scmp.eq.s32.totalorder %s29, 0
    %p145 = por %p143, %p144
    %p146 = scmp.ne.s32.totalorder %s134, %s135
    %p147 = scmp.eq.s32.totalorder %s30, 1
    %p148 = por %p146, %p147
    %p150 = scmp.ne.s32.totalorder %s135, %s149
    %p151 = scmp.eq.s32.totalorder %s30, 0
    %p152 = por %p150, %p151
    %s154 = sadd.s32 %s153, 1
    %p157 = scmp.eq.s32.totalorder %s24, 1
    %p158 = scmp.ne.s32.totalorder %s153, %s155
    %p159 = scmp.eq.s32.totalorder %s24, 0
    %p160 = por %p158, %p159
    %p161 = scmp.ne.s32.totalorder %s153, %s155
    %p162 = scmp.eq.s32.totalorder %s29, 1
    %p163 = por %p161, %p162
    %p164 = scmp.ne.s32.totalorder %s155, %s156
    %p165 = scmp.eq.s32.totalorder %s29, 0
    %p166 = por %p164, %p165
    %p167 = scmp.ne.s32.totalorder %s155, %s156
    %p168 = scmp.eq.s32.totalorder %s30, 1
    %p169 = por %p167, %p168
    %p171 = scmp.ne.s32.totalorder %s156, %s170
    %p172 = scmp.eq.s32.totalorder %s30, 0
    %p173 = por %p171, %p172
    %s174 = ssub.s32 %s31, %s43
    %p175 = scmp.eq.s32.totalorder %s174, 0
    %s177 = sadd.s32 %s176, 1
    %s178 = scalar_select %p175, %s176, %s177
    %p181 = pneg %p175
    %p182 = scmp.eq.s32.totalorder %s24, 1
    %p183 = por %p181, %p182
    %p184 = scmp.ne.s32.totalorder %s176, %s179
    %p185 = scmp.eq.s32.totalorder %s24, 0
    %p186 = por %p184, %p185
    %p187 = scmp.ne.s32.totalorder %s176, %s179
    %p188 = scmp.eq.s32.totalorder %s29, 1
    %p189 = por %p187, %p188
    %p190 = scmp.ne.s32.totalorder %s179, %s180
    %p191 = scmp.eq.s32.totalorder %s29, 0
    %p192 = por %p190, %p191
    %p193 = scmp.ne.s32.totalorder %s179, %s180
    %p194 = scmp.eq.s32.totalorder %s30, 1
    %p195 = por %p193, %p194
    %p197 = scmp.ne.s32.totalorder %s180, %s196
    %p198 = scmp.eq.s32.totalorder %s30, 0
    %p199 = por %p197, %p198
    %s200 = ssub.s32 %s31, %s43
    %p201 = scmp.eq.s32.totalorder %s200, 0
    %s203 = sadd.s32 %s202, 1
    %s204 = scalar_select %p201, %s202, %s203
    %p207 = pneg %p201
    %p208 = scmp.eq.s32.totalorder %s24, 1
    %p209 = por %p207, %p208
    %p210 = scmp.ne.s32.totalorder %s202, %s205
    %p211 = scmp.eq.s32.totalorder %s24, 0
    %p212 = por %p210, %p211
    %p213 = scmp.ne.s32.totalorder %s202, %s205
    %p214 = scmp.eq.s32.totalorder %s29, 1
    %p215 = por %p213, %p214
    %p216 = scmp.ne.s32.totalorder %s205, %s206
    %p217 = scmp.eq.s32.totalorder %s29, 0
    %p218 = por %p216, %p217
    %p219 = scmp.ne.s32.totalorder %s205, %s206
    %p220 = scmp.eq.s32.totalorder %s30, 1
    %p221 = por %p219, %p220
    %p223 = scmp.ne.s32.totalorder %s206, %s222
    %p224 = scmp.eq.s32.totalorder %s30, 0
    %p225 = por %p223, %p224
    %p226 = scmp.le.s32.totalorder 1, %s24
    %p227 = scmp.lt.s32.totalorder %s24, 3
    %p228 = pnand %p226, %p227
    %p229 = pneg %p228
    // Predicated region
    $region9: #{gnn_forward.2} parent=5 // pred_check
      _
    $region10: #{gnn_forward.2} parent=5 // pred_check_branch
      %231 = sbr.rel (%p228) target = $region12
    $region11: #{gnn_forward.2} parent=5 // pred_region
      %s232 = ssub.s32 %s24, 1
      // Predicated region
      $region13: #{gnn_forward.2} parent=11 // pred_check
        %p233 = pneg %p145
      $region14: #{gnn_forward.2} parent=11 // pred_check_branch
        %235 = sbr.rel (%p233) target = $region16
      $region15: #{gnn_forward.2} parent=11 // pred_region
        _
      $region16: #{gnn_forward.2} parent=11 // pred_fallthru
        _
      // Predicated region
      $region17: #{gnn_forward.2} parent=11 // pred_check
        %p236 = pneg %p166
      $region18: #{gnn_forward.2} parent=11 // pred_check_branch
        %238 = sbr.rel (%p236) target = $region20
      $region19: #{gnn_forward.2} parent=11 // pred_region
        _
      $region20: #{gnn_forward.2} parent=11 // pred_fallthru
        _
    $region12: #{gnn_forward.2} parent=5 // pred_fallthru
      _
    %p239 = scmp.lt.s32.totalorder %s24, 2
    // Predicated region
    $region21: #{gnn_forward.2} parent=5 // pred_check
      %p240 = pneg %p239
    $region22: #{gnn_forward.2} parent=5 // pred_check_branch
      %242 = sbr.rel (%p240) target = $region24
    $region23: #{gnn_forward.2} parent=5 // pred_region
      // Predicated region
      $region25: #{gnn_forward.2} parent=23 // pred_check
        %p243 = pneg %p62
      $region26: #{gnn_forward.2} parent=23 // pred_check_branch
        %245 = sbr.rel (%p243) target = $region28
      $region27: #{gnn_forward.2} parent=23 // pred_region
        %s246 = sadd.s32 %s31, %s32
        %s247 = sld [smem:[#allocation5 + %s246]]
        %s248 = smul.u32 8, %s31
        %p249 = scmp.lt.s32.totalorder %s248, 15
        %s250 = scalar_select %p249, %s248, 15
        %p251 = scmp.lt.s32.totalorder %s247, 0
        %s252 = scalar_select %p251, %s247, 0
        %s253 = sadd.s32 %s252, %s250
        %s254 = smul.addr %s253, 2
        %s255 = scalar_lea.vmem %s2, %s254
        %s256 = sadd.s32 %s31, %s32
        %s257 = sld [smem:[#allocation5 + %s256]]
        %s258 = smul.u32 8, %s31
      $region28: #{gnn_forward.2} parent=23 // pred_fallthru
        _
      // Predicated region
      $region29: #{gnn_forward.2} parent=23 // pred_check
        %p259 = pneg %p92
      $region30: #{gnn_forward.2} parent=23 // pred_check_branch
        %261 = sbr.rel (%p259) target = $region32
      $region31: #{gnn_forward.2} parent=23 // pred_region
        %s262 = sadd.s32 %s31, %s32
        %s263 = sld [smem:[#allocation5 + %s262]]
        %s264 = smul.u32 16, %s263
        %p265 = scmp.lt.s32.totalorder %s264, 15
        %s266 = scalar_select %p265, %s264, 15
        %s267 = smul.addr %s266, 4
        %s268 = scalar_lea.vmem %s3, %s267
        %s269 = sadd.s32 %s31, %s32
        %s270 = sld [smem:[#allocation5 + %s269]]
        %s271 = smul.u32 16, %s270
      $region32: #{gnn_forward.2} parent=23 // pred_fallthru
        _
      // Predicated region
      $region33: #{gnn_forward.2} parent=23 // pred_check
        %p272 = pneg %p118
      $region34: #{gnn_forward.2} parent=23 // pred_check_branch
        %274 = sbr.rel (%p272) target = $region36
      $region35: #{gnn_forward.2} parent=23 // pred_region
        %s275 = smul.u32 8, %s31
        %p276 = scmp.lt.s32.totalorder %s275, 15
        %s277 = scalar_select %p276, %s275, 15
        %s278 = smul.addr %s277, 4
        %s279 = scalar_lea.vmem %s4, %s278
        %s280 = smul.u32 8, %s31
      $region36: #{gnn_forward.2} parent=23 // pred_fallthru
        _
      // Predicated region
      $region37: #{gnn_forward.2} parent=23 // pred_check
        %p281 = pneg %p186
      $region38: #{gnn_forward.2} parent=23 // pred_check_branch
        %283 = sbr.rel (%p281) target = $region40
      $region39: #{gnn_forward.2} parent=23 // pred_region
        %s284 = smul.u32 8, %s31
        %p285 = scmp.lt.s32.totalorder %s284, 15
        %s286 = scalar_select %p285, %s284, 15
        %s287 = smul.addr %s286, 8
        %s288 = scalar_lea.vmem %s7, %s287
        %s289 = smul.u32 8, %s31
      $region40: #{gnn_forward.2} parent=23 // pred_fallthru
        _
    $region24: #{gnn_forward.2} parent=5 // pred_fallthru
      _
    %p290 = scmp.le.s32.totalorder 1, %s24
    %p291 = scmp.lt.s32.totalorder %s24, 3
    %p292 = pnand %p290, %p291
    %p293 = pneg %p292
    // Predicated region
    $region41: #{gnn_forward.2} parent=5 // pred_check
      _
    $region42: #{gnn_forward.2} parent=5 // pred_check_branch
      %295 = sbr.rel (%p292) target = $region44
    $region43: #{gnn_forward.2} parent=5 // pred_region
      %s296 = ssub.s32 %s24, 1
      %s297 = sadd.s32 %s33, %s34
      %s298 = sld [smem:[#allocation5 + %s297]]
      %s299 = smul.u32 8, %s33
      %p300 = scmp.lt.s32.totalorder %s299, 15
      %s301 = scalar_select %p300, %s299, 15
      %p302 = scmp.lt.s32.totalorder %s298, 0
      %s303 = scalar_select %p302, %s298, 0
      %s304 = sadd.s32 %s303, %s301
      %s305 = smul.addr %s304, 2
      %s306 = scalar_lea.vmem %s2, %s305
      %p307 = pneg %p68
      %p308 = pneg %p65
      %s309 = sadd.s32 %s33, %s34
      %s310 = sld [smem:[#allocation5 + %s309]]
      %s311 = smul.u32 16, %s310
      %p312 = scmp.lt.s32.totalorder %s311, 15
      %s313 = scalar_select %p312, %s311, 15
      %s314 = smul.addr %s313, 4
      %s315 = scalar_lea.vmem %s3, %s314
      %p316 = pneg %p98
      %p317 = pneg %p95
      %s318 = smul.u32 8, %s33
      %p319 = scmp.lt.s32.totalorder %s318, 15
      %s320 = scalar_select %p319, %s318, 15
      %s321 = smul.addr %s320, 4
      %s322 = scalar_lea.vmem %s4, %s321
      %p323 = pneg %p124
      %p324 = pneg %p121
      %p325 = pneg %p145
      %p326 = pneg %p142
      %p327 = pneg %p166
      %p328 = pneg %p163
      %s329 = smul.u32 8, %s33
      %p330 = scmp.lt.s32.totalorder %s329, 15
      %s331 = scalar_select %p330, %s329, 15
      %s332 = smul.addr %s331, 8
      %s333 = scalar_lea.vmem %s7, %s332
      %p334 = pneg %p192
      %p335 = pneg %p189
      %p336 = pneg %p218
      %p337 = pneg %p215
      %s338 = smul.u32 8, %s33
      %p339 = scmp.lt.s32.totalorder %s338, 15
      %s340 = scalar_select %p339, %s338, 15
      %s341 = smul.addr %s340, 4
      %s342 = scalar_lea.vmem %s8, %s341
      %s343 = sadd.s32 %s33, %s34
      %s344 = sld [smem:[#allocation5 + %s343]]
      %s345 = smul.u32 8, %s33
      %p346 = scmp.lt.s32.totalorder %s345, 15
      %s347 = scalar_select %p346, %s345, 15
      %p348 = scmp.lt.s32.totalorder %s344, 0
      %s349 = scalar_select %p348, %s344, 0
      %s350 = sadd.s32 %s349, %s347
      %s351 = smul.addr %s350, 2
      %s352 = scalar_lea.vmem %s2, %s351
      %s353 = sadd.s32 %s33, %s34
      %s354 = sld [smem:[#allocation5 + %s353]]
      %s355 = smul.u32 8, %s33
      %s356 = sadd.s32 %s33, %s34
      %s357 = sld [smem:[#allocation5 + %s356]]
      %s358 = smul.u32 16, %s357
      %p359 = scmp.lt.s32.totalorder %s358, 15
      %s360 = scalar_select %p359, %s358, 15
      %s361 = smul.addr %s360, 4
      %s362 = scalar_lea.vmem %s3, %s361
      %s363 = sadd.s32 %s33, %s34
      %s364 = sld [smem:[#allocation5 + %s363]]
      %s365 = smul.u32 16, %s364
      %s366 = smul.u32 8, %s33
      %p367 = scmp.lt.s32.totalorder %s366, 15
      %s368 = scalar_select %p367, %s366, 15
      %s369 = smul.addr %s368, 4
      %s370 = scalar_lea.vmem %s4, %s369
      %s371 = smul.u32 8, %s33
      %s372 = smul.u32 8, %s33
      %p373 = scmp.lt.s32.totalorder %s372, 15
      %s374 = scalar_select %p373, %s372, 15
      %s375 = smul.addr %s374, 8
      %s376 = scalar_lea.vmem %s7, %s375
      %s377 = smul.u32 8, %s33
      %s378 = smul.u32 8, %s33
      %p379 = scmp.lt.s32.totalorder %s378, 15
      %s380 = scalar_select %p379, %s378, 15
      %s381 = smul.addr %s380, 4
      %s382 = scalar_lea.vmem %s8, %s381
      %s383 = smul.u32 8, %s33
      %p385 = scmp.eq.s32.totalorder %s34, 0
      // Predicated region
      $region45: #{gnn_forward.2} parent=43 // pred_check
        %p386 = pneg %p385
      $region46: #{gnn_forward.2} parent=43 // pred_check_branch
        %388 = sbr.rel (%p386) target = $region48
      $region47: #{gnn_forward.2} parent=43 // pred_region
        %389 = vst [vmem:[#allocation2] sm:$0xff] 0.0
        %390 = vst [vmem:[#allocation2 + $0x8] sm:$0xff] 0.0
        %391 = vst [vmem:[#allocation2 + $0x10] sm:$0xff] 0.0
        %392 = vst [vmem:[#allocation2 + $0x18] sm:$0xff] 0.0
        %393 = vst [vmem:[#allocation2 + $0x20] sm:$0xff] 0.0
        %394 = vst [vmem:[#allocation2 + $0x28] sm:$0xff] 0.0
        %395 = vst [vmem:[#allocation2 + $0x30] sm:$0xff] 0.0
        %396 = vst [vmem:[#allocation2 + $0x38] sm:$0xff] 0.0
      $region48: #{gnn_forward.2} parent=43 // pred_fallthru
        _
      %s397 = sadd.s32 %s33, %s34
      %s398 = sld [smem:[#allocation4 + %s397]]
      %p399 = scmp.gt.s32.totalorder %s398, 0
      // Predicated region
      $region49: #{gnn_forward.2} parent=43 // pred_check
        %p400 = pneg %p399
      $region50: #{gnn_forward.2} parent=43 // pred_check_branch
        %402 = sbr.rel (%p400) target = $region52
      $region51: #{gnn_forward.2} parent=43 // pred_region
        %v403 = vld [vmem:[%s352] sm:$0x3]
        %v404 = vld [vmem:[%s352 + $0x2] sm:$0x3]
        %v405 = vld [vmem:[%s352 + $0x4] sm:$0x3]
        %v406 = vld [vmem:[%s352 + $0x6] sm:$0x3]
        %v407 = vld [vmem:[%s352 + $0x8] sm:$0x3]
        %v408 = vld [vmem:[%s352 + $0xa] sm:$0x3]
        %v409 = vld [vmem:[%s352 + $0xc] sm:$0x3]
        %v410 = vld [vmem:[%s352 + $0xe] sm:$0x3]
        %v411 = vunpack.c.l.s8.bf16 %v403
        %v412 = vunpack.c.l.s8.bf16 %v404
        %v413 = vunpack.c.l.s8.bf16 %v405
        %v414 = vunpack.c.l.s8.bf16 %v406
        %v415 = vunpack.c.l.s8.bf16 %v407
        %v416 = vunpack.c.l.s8.bf16 %v408
        %v417 = vunpack.c.l.s8.bf16 %v409
        %v418 = vunpack.c.l.s8.bf16 %v410
        %v419 = vld [vmem:[#allocation2] sm:$0xff]
        %v420 = vld [vmem:[#allocation2 + $0x8] sm:$0xff]
        %v421 = vld [vmem:[#allocation2 + $0x10] sm:$0xff]
        %v422 = vld [vmem:[#allocation2 + $0x18] sm:$0xff]
        %v423 = vld [vmem:[#allocation2 + $0x20] sm:$0xff]
        %v424 = vld [vmem:[#allocation2 + $0x28] sm:$0xff]
        %v425 = vld [vmem:[#allocation2 + $0x30] sm:$0xff]
        %v426 = vld [vmem:[#allocation2 + $0x38] sm:$0xff]
        %v427 = vld [vmem:[%s362] sm:$0xf]
        %v428 = vld [vmem:[%s362 + $0x4] sm:$0xf]
        %v429 = vld [vmem:[%s362 + $0x8] sm:$0xf]
        %v430 = vld [vmem:[%s362 + $0xc] sm:$0xf]
        %v431 = vld [vmem:[%s362 + $0x10] sm:$0xf]
        %v432 = vld [vmem:[%s362 + $0x14] sm:$0xf]
        %v433 = vld [vmem:[%s362 + $0x18] sm:$0xf]
        %v434 = vld [vmem:[%s362 + $0x1c] sm:$0xf]
        %v435 = vld [vmem:[%s362 + $0x20] sm:$0xf]
        %v436 = vld [vmem:[%s362 + $0x24] sm:$0xf]
        %v437 = vld [vmem:[%s362 + $0x28] sm:$0xf]
        %v438 = vld [vmem:[%s362 + $0x2c] sm:$0xf]
        %v439 = vld [vmem:[%s362 + $0x30] sm:$0xf]
        %v440 = vld [vmem:[%s362 + $0x34] sm:$0xf]
        %v441 = vld [vmem:[%s362 + $0x38] sm:$0xf]
        %v442 = vld [vmem:[%s362 + $0x3c] sm:$0xf]
        %v451 = vunpack.c.l.b16 %v411
        %v452 = vunpack.c.l.b16 %v412
        %v453 = vunpack.c.l.b16 %v413
        %v454 = vunpack.c.l.b16 %v414
        %v455 = vunpack.c.l.b16 %v415
        %v456 = vunpack.c.l.b16 %v416
        %v457 = vunpack.c.l.b16 %v417
        %v458 = vunpack.c.l.b16 %v418
        %v459 = vpack.c.b16 %v452, %v451
        %v460 = vpack.c.b16 %v454, %v453
        %v461 = vpack.c.b16 %v456, %v455
        %v462 = vpack.c.b16 %v458, %v457
        %v483 = vunpack.c.l.b16 %v427
        %v484 = vunpack.c.l.b16 %v428
        %v485 = vunpack.c.l.b16 %v429
        %v486 = vunpack.c.l.b16 %v430
        %v487 = vunpack.c.l.b16 %v431
        %v488 = vunpack.c.l.b16 %v432
        %v489 = vunpack.c.l.b16 %v433
        %v490 = vunpack.c.l.b16 %v434
        %v491 = vunpack.c.l.b16 %v435
        %v492 = vunpack.c.l.b16 %v436
        %v493 = vunpack.c.l.b16 %v437
        %v494 = vunpack.c.l.b16 %v438
        %v495 = vunpack.c.l.b16 %v439
        %v496 = vunpack.c.l.b16 %v440
        %v497 = vunpack.c.l.b16 %v441
        %v498 = vunpack.c.l.b16 %v442
        %v499 = vpack.c.b16 %v484, %v483
        %v500 = vpack.c.b16 %v486, %v485
        %v501 = vpack.c.b16 %v488, %v487
        %v502 = vpack.c.b16 %v490, %v489
        %v503 = vpack.c.b16 %v492, %v491
        %v504 = vpack.c.b16 %v494, %v493
        %v505 = vpack.c.b16 %v496, %v495
        %v506 = vpack.c.b16 %v498, %v497
        %515 = vmatprep.subr.bf16.mxu0 0
        %516 = vmatpush1.bf16.msra.mxu0 %v499
        %517 = vmatprep.subr.bf16.mxu0 0
        %518 = vmatpush1.bf16.msra.mxu0 %v500
        %519 = vmatprep.subr.bf16.mxu0 0
        %520 = vmatpush1.bf16.msra.mxu0 %v501
        %521 = vmatprep.subr.bf16.mxu0 0
        %522 = vmatpush1.bf16.msra.mxu0 %v502
        %523 = vmatprep.subr.bf16.mxu0 0
        %524 = vmatpush1.bf16.msra.mxu0 %v503
        %525 = vmatprep.subr.bf16.mxu0 0
        %526 = vmatpush1.bf16.msra.mxu0 %v504
        %527 = vmatprep.subr.bf16.mxu0 0
        %528 = vmatpush1.bf16.msra.mxu0 %v505
        %529 = vmatprep.subr.bf16.mxu0 0
        %530 = vmatpush1.bf16.msra.mxu0 %v506
        %531 = vmatprep.subr.bf16.mxu0 0
        %532 = vmatpush1.bf16.msra.mxu0 0
        %533 = vmatprep.subr.bf16.mxu0 0
        %534 = vmatpush1.bf16.msra.mxu0 0
        %535 = vmatprep.subr.bf16.mxu0 0
        %536 = vmatpush1.bf16.msra.mxu0 0
        %537 = vmatprep.subr.bf16.mxu0 0
        %538 = vmatpush1.bf16.msra.mxu0 0
        %539 = vmatprep.subr.bf16.mxu0 0
        %540 = vmatpush1.bf16.msra.mxu0 0
        %541 = vmatprep.subr.bf16.mxu0 0
        %542 = vmatpush1.bf16.msra.mxu0 0
        %543 = vmatprep.subr.bf16.mxu0 0
        %544 = vmatpush1.bf16.msra.mxu0 0
        %545 = vmatprep.subr.bf16.mxu0 0
        %546 = vmatpush1.bf16.msra.mxu0 0
        %547 = vmatprep.mubr.bf16.mxu0 0
        %548 = vmatmul.mubr.bf16.gmra.mrb[0].mxu0 %v459
        %v549 = vpop.f32.mrb[0].mxu0
        %v550 = vadd.f32 0.0, %v549
        %v551 = vpop.f32.mrb[0].mxu0
        %v552 = vpop.f32.mrb[0].mxu0
        %v553 = vadd.f32 0.0, %v552
        %v554 = vpop.f32.mrb[0].mxu0
        %555 = vmatprep.mubr.bf16.mxu0 0
        %556 = vmatmul.mubr.bf16.gmra.mrb[0].mxu0 %v460
        %v557 = vpop.f32.mrb[0].mxu0
        %v558 = vadd.f32 0.0, %v557
        %v559 = vpop.f32.mrb[0].mxu0
        %v560 = vpop.f32.mrb[0].mxu0
        %v561 = vadd.f32 0.0, %v560
        %v562 = vpop.f32.mrb[0].mxu0
        %563 = vmatprep.mubr.bf16.mxu0 0
        %564 = vmatmul.mubr.bf16.gmra.mrb[0].mxu0 %v461
        %v565 = vpop.f32.mrb[0].mxu0
        %v566 = vadd.f32 0.0, %v565
        %v567 = vpop.f32.mrb[0].mxu0
        %v568 = vpop.f32.mrb[0].mxu0
        %v569 = vadd.f32 0.0, %v568
        %v570 = vpop.f32.mrb[0].mxu0
        %571 = vmatprep.mubr.bf16.mxu0 0
        %572 = vmatmul.mubr.bf16.gmra.mrb[0].mxu0 %v462
        %v573 = vpop.f32.mrb[0].mxu0
        %v574 = vadd.f32 0.0, %v573
        %v575 = vpop.f32.mrb[0].mxu0
        %v576 = vpop.f32.mrb[0].mxu0
        %v577 = vadd.f32 0.0, %v576
        %v578 = vpop.f32.mrb[0].mxu0
        %579 = vdwg.mxu0
        %v580 = vadd.f32 %v419, %v550
        %v581 = vadd.f32 %v420, %v553
        %v582 = vadd.f32 %v421, %v558
        %v583 = vadd.f32 %v422, %v561
        %v584 = vadd.f32 %v423, %v566
        %v585 = vadd.f32 %v424, %v569
        %v586 = vadd.f32 %v425, %v574
        %v587 = vadd.f32 %v426, %v577
        %588 = vst [vmem:[#allocation2] sm:$0xff] %v580
        %589 = vst [vmem:[#allocation2 + $0x8] sm:$0xff] %v581
        %590 = vst [vmem:[#allocation2 + $0x10] sm:$0xff] %v582
        %591 = vst [vmem:[#allocation2 + $0x18] sm:$0xff] %v583
        %592 = vst [vmem:[#allocation2 + $0x20] sm:$0xff] %v584
        %593 = vst [vmem:[#allocation2 + $0x28] sm:$0xff] %v585
        %594 = vst [vmem:[#allocation2 + $0x30] sm:$0xff] %v586
        %595 = vst [vmem:[#allocation2 + $0x38] sm:$0xff] %v587
      $region52: #{gnn_forward.2} parent=43 // pred_fallthru
        _
      // Predicated region
      $region53: #{gnn_forward.2} parent=43 // pred_check
        %p596 = pneg %p385
      $region54: #{gnn_forward.2} parent=43 // pred_check_branch
        %598 = sbr.rel (%p596) target = $region56
      $region55: #{gnn_forward.2} parent=43 // pred_region
        %v599 = vld [vmem:[#allocation2] sm:$0xff]
        %v600 = vld [vmem:[#allocation2 + $0x8] sm:$0xff]
        %v601 = vld [vmem:[#allocation2 + $0x10] sm:$0xff]
        %v602 = vld [vmem:[#allocation2 + $0x18] sm:$0xff]
        %v603 = vld [vmem:[#allocation2 + $0x20] sm:$0xff]
        %v604 = vld [vmem:[#allocation2 + $0x28] sm:$0xff]
        %v605 = vld [vmem:[#allocation2 + $0x30] sm:$0xff]
        %v606 = vld [vmem:[#allocation2 + $0x38] sm:$0xff]
        %v607 = vld [vmem:[%s376] sm:$0xff]
        %v608 = vld [vmem:[%s376 + $0x8] sm:$0xff]
        %v609 = vld [vmem:[%s376 + $0x10] sm:$0xff]
        %v610 = vld [vmem:[%s376 + $0x18] sm:$0xff]
        %v611 = vld [vmem:[%s376 + $0x20] sm:$0xff]
        %v612 = vld [vmem:[%s376 + $0x28] sm:$0xff]
        %v613 = vld [vmem:[%s376 + $0x30] sm:$0xff]
        %v614 = vld [vmem:[%s376 + $0x38] sm:$0xff]
        %616 = vset.pattern.permute.xlu0 0
        %617 = vperm.xlu0 %616, %v607
        %v618 = vpop.permute.xlu0 %617
        %621 = vset.pattern.permute.xlu0 0
        %622 = vperm.xlu0 %621, %v608
        %v623 = vpop.permute.xlu0 %622
        %626 = vset.pattern.permute.xlu0 0
        %627 = vperm.xlu0 %626, %v609
        %v628 = vpop.permute.xlu0 %627
        %631 = vset.pattern.permute.xlu0 0
        %632 = vperm.xlu0 %631, %v610
        %v633 = vpop.permute.xlu0 %632
        %636 = vset.pattern.permute.xlu0 0
        %637 = vperm.xlu0 %636, %v611
        %v638 = vpop.permute.xlu0 %637
        %641 = vset.pattern.permute.xlu0 0
        %642 = vperm.xlu0 %641, %v612
        %v643 = vpop.permute.xlu0 %642
        %646 = vset.pattern.permute.xlu0 0
        %647 = vperm.xlu0 %646, %v613
        %v648 = vpop.permute.xlu0 %647
        %651 = vset.pattern.permute.xlu0 0
        %652 = vperm.xlu0 %651, %v614
        %v653 = vpop.permute.xlu0 %652
        %v655 = vmul.f32 %v599, %v618
        %v656 = vmul.f32 %v600, %v623
        %v657 = vmul.f32 %v601, %v628
        %v658 = vmul.f32 %v602, %v633
        %v659 = vmul.f32 %v603, %v638
        %v660 = vmul.f32 %v604, %v643
        %v661 = vmul.f32 %v605, %v648
        %v662 = vmul.f32 %v606, %v653
        %v663 = vld [vmem:[%s370] sm:$0xf]
        %v664 = vld [vmem:[%s370 + $0x4] sm:$0xf]
        %v665 = vld [vmem:[%s370 + $0x8] sm:$0xf]
        %v666 = vld [vmem:[%s370 + $0xc] sm:$0xf]
        %v667 = vld [vmem:[%s370 + $0x10] sm:$0xf]
        %v668 = vld [vmem:[%s370 + $0x14] sm:$0xf]
        %v669 = vld [vmem:[%s370 + $0x18] sm:$0xf]
        %v670 = vld [vmem:[%s370 + $0x1c] sm:$0xf]
        %v671 = vld [vmem:[%s5] sm:$0xf]
        %v672 = vld [vmem:[%s5 + $0x4] sm:$0xf]
        %v673 = vld [vmem:[%s5 + $0x8] sm:$0xf]
        %v674 = vld [vmem:[%s5 + $0xc] sm:$0xf]
        %v675 = vld [vmem:[%s5 + $0x10] sm:$0xf]
        %v676 = vld [vmem:[%s5 + $0x14] sm:$0xf]
        %v677 = vld [vmem:[%s5 + $0x18] sm:$0xf]
        %v678 = vld [vmem:[%s5 + $0x1c] sm:$0xf]
        %v679 = vld [vmem:[%s5 + $0x20] sm:$0xf]
        %v680 = vld [vmem:[%s5 + $0x24] sm:$0xf]
        %v681 = vld [vmem:[%s5 + $0x28] sm:$0xf]
        %v682 = vld [vmem:[%s5 + $0x2c] sm:$0xf]
        %v683 = vld [vmem:[%s5 + $0x30] sm:$0xf]
        %v684 = vld [vmem:[%s5 + $0x34] sm:$0xf]
        %v685 = vld [vmem:[%s5 + $0x38] sm:$0xf]
        %v686 = vld [vmem:[%s5 + $0x3c] sm:$0xf]
        %v695 = vunpack.c.l.b16 %v663
        %v696 = vunpack.c.l.b16 %v664
        %v697 = vunpack.c.l.b16 %v665
        %v698 = vunpack.c.l.b16 %v666
        %v699 = vunpack.c.l.b16 %v667
        %v700 = vunpack.c.l.b16 %v668
        %v701 = vunpack.c.l.b16 %v669
        %v702 = vunpack.c.l.b16 %v670
        %v703 = vpack.c.b16 %v696, %v695
        %v704 = vpack.c.b16 %v698, %v697
        %v705 = vpack.c.b16 %v700, %v699
        %v706 = vpack.c.b16 %v702, %v701
        %v727 = vunpack.c.l.b16 %v671
        %v728 = vunpack.c.l.b16 %v672
        %v729 = vunpack.c.l.b16 %v673
        %v730 = vunpack.c.l.b16 %v674
        %v731 = vunpack.c.l.b16 %v675
        %v732 = vunpack.c.l.b16 %v676
        %v733 = vunpack.c.l.b16 %v677
        %v734 = vunpack.c.l.b16 %v678
        %v735 = vunpack.c.l.b16 %v679
        %v736 = vunpack.c.l.b16 %v680
        %v737 = vunpack.c.l.b16 %v681
        %v738 = vunpack.c.l.b16 %v682
        %v739 = vunpack.c.l.b16 %v683
        %v740 = vunpack.c.l.b16 %v684
        %v741 = vunpack.c.l.b16 %v685
        %v742 = vunpack.c.l.b16 %v686
        %v743 = vpack.c.b16 %v728, %v727
        %v744 = vpack.c.b16 %v730, %v729
        %v745 = vpack.c.b16 %v732, %v731
        %v746 = vpack.c.b16 %v734, %v733
        %v747 = vpack.c.b16 %v736, %v735
        %v748 = vpack.c.b16 %v738, %v737
        %v749 = vpack.c.b16 %v740, %v739
        %v750 = vpack.c.b16 %v742, %v741
        %759 = vmatprep.subr.bf16.mxu0 0
        %760 = vmatpush1.bf16.msra.mxu0 %v743
        %761 = vmatprep.subr.bf16.mxu0 0
        %762 = vmatpush1.bf16.msra.mxu0 %v744
        %763 = vmatprep.subr.bf16.mxu0 0
        %764 = vmatpush1.bf16.msra.mxu0 %v745
        %765 = vmatprep.subr.bf16.mxu0 0
        %766 = vmatpush1.bf16.msra.mxu0 %v746
        %767 = vmatprep.subr.bf16.mxu0 0
        %768 = vmatpush1.bf16.msra.mxu0 %v747
        %769 = vmatprep.subr.bf16.mxu0 0
        %770 = vmatpush1.bf16.msra.mxu0 %v748
        %771 = vmatprep.subr.bf16.mxu0 0
        %772 = vmatpush1.bf16.msra.mxu0 %v749
        %773 = vmatprep.subr.bf16.mxu0 0
        %774 = vmatpush1.bf16.msra.mxu0 %v750
        %775 = vmatprep.subr.bf16.mxu0 0
        %776 = vmatpush1.bf16.msra.mxu0 0
        %777 = vmatprep.subr.bf16.mxu0 0
        %778 = vmatpush1.bf16.msra.mxu0 0
        %779 = vmatprep.subr.bf16.mxu0 0
        %780 = vmatpush1.bf16.msra.mxu0 0
        %781 = vmatprep.subr.bf16.mxu0 0
        %782 = vmatpush1.bf16.msra.mxu0 0
        %783 = vmatprep.subr.bf16.mxu0 0
        %784 = vmatpush1.bf16.msra.mxu0 0
        %785 = vmatprep.subr.bf16.mxu0 0
        %786 = vmatpush1.bf16.msra.mxu0 0
        %787 = vmatprep.subr.bf16.mxu0 0
        %788 = vmatpush1.bf16.msra.mxu0 0
        %789 = vmatprep.subr.bf16.mxu0 0
        %790 = vmatpush1.bf16.msra.mxu0 0
        %791 = vmatprep.mubr.bf16.mxu0 0
        %792 = vmatmul.mubr.bf16.gmra.mrb[0].mxu0 %v703
        %v793 = vpop.f32.mrb[0].mxu0
        %v794 = vadd.f32 0.0, %v793
        %v795 = vpop.f32.mrb[0].mxu0
        %v796 = vpop.f32.mrb[0].mxu0
        %v797 = vadd.f32 0.0, %v796
        %v798 = vpop.f32.mrb[0].mxu0
        %799 = vmatprep.mubr.bf16.mxu0 0
        %800 = vmatmul.mubr.bf16.gmra.mrb[0].mxu0 %v704
        %v801 = vpop.f32.mrb[0].mxu0
        %v802 = vadd.f32 0.0, %v801
        %v803 = vpop.f32.mrb[0].mxu0
        %v804 = vpop.f32.mrb[0].mxu0
        %v805 = vadd.f32 0.0, %v804
        %v806 = vpop.f32.mrb[0].mxu0
        %807 = vmatprep.mubr.bf16.mxu0 0
        %808 = vmatmul.mubr.bf16.gmra.mrb[0].mxu0 %v705
        %v809 = vpop.f32.mrb[0].mxu0
        %v810 = vadd.f32 0.0, %v809
        %v811 = vpop.f32.mrb[0].mxu0
        %v812 = vpop.f32.mrb[0].mxu0
        %v813 = vadd.f32 0.0, %v812
        %v814 = vpop.f32.mrb[0].mxu0
        %815 = vmatprep.mubr.bf16.mxu0 0
        %816 = vmatmul.mubr.bf16.gmra.mrb[0].mxu0 %v706
        %v817 = vpop.f32.mrb[0].mxu0
        %v818 = vadd.f32 0.0, %v817
        %v819 = vpop.f32.mrb[0].mxu0
        %v820 = vpop.f32.mrb[0].mxu0
        %v821 = vadd.f32 0.0, %v820
        %v822 = vpop.f32.mrb[0].mxu0
        %823 = vdwg.mxu0
        %v824 = vadd.f32 %v655, %v794
        %v825 = vadd.f32 %v656, %v797
        %v826 = vadd.f32 %v657, %v802
        %v827 = vadd.f32 %v658, %v805
        %v828 = vadd.f32 %v659, %v810
        %v829 = vadd.f32 %v660, %v813
        %v830 = vadd.f32 %v661, %v818
        %v831 = vadd.f32 %v662, %v821
        %v832 = vld [vmem:[%s6] sm:$0x1]
        %v834 = vlaneseq
        %v835 = vshrl.u32 %v834, 7
        %v836 = vsub.s32 0, %v835
        %v837 = vrot.slane %v832, %v836
        %v839 = vadd.f32 %v824, %v837
        %v840 = vadd.f32 %v825, %v837
        %v841 = vadd.f32 %v826, %v837
        %v842 = vadd.f32 %v827, %v837
        %v843 = vadd.f32 %v828, %v837
        %v844 = vadd.f32 %v829, %v837
        %v845 = vadd.f32 %v830, %v837
        %v846 = vadd.f32 %v831, %v837
        %v847 = vmax.f32 %v839, 0.0
        %v848 = vmax.f32 %v840, 0.0
        %v849 = vmax.f32 %v841, 0.0
        %v850 = vmax.f32 %v842, 0.0
        %v851 = vmax.f32 %v843, 0.0
        %v852 = vmax.f32 %v844, 0.0
        %v853 = vmax.f32 %v845, 0.0
        %v854 = vmax.f32 %v846, 0.0
        %v855 = vpack.c.bf16 %v848, %v847
        %v856 = vpack.c.bf16 %v850, %v849
        %v857 = vpack.c.bf16 %v852, %v851
        %v858 = vpack.c.bf16 %v854, %v853
        %v863 = vunpack.c.l.b16 %v855
        %v864 = vunpack.c.h.b16 %v855
        %v865 = vunpack.c.l.b16 %v856
        %v866 = vunpack.c.h.b16 %v856
        %v867 = vunpack.c.l.b16 %v857
        %v868 = vunpack.c.h.b16 %v857
        %v869 = vunpack.c.l.b16 %v858
        %v870 = vunpack.c.h.b16 %v858
        %v871 = vpack.c.b16 %v863, %v863
        %v872 = vpack.c.b16 %v864, %v864
        %v873 = vpack.c.b16 %v865, %v865
        %v874 = vpack.c.b16 %v866, %v866
        %v875 = vpack.c.b16 %v867, %v867
        %v876 = vpack.c.b16 %v868, %v868
        %v877 = vpack.c.b16 %v869, %v869
        %v878 = vpack.c.b16 %v870, %v870
        %887 = vst [vmem:[%s382] sm:$0xf] %v871
        %888 = vst [vmem:[%s382 + $0x4] sm:$0xf] %v872
        %889 = vst [vmem:[%s382 + $0x8] sm:$0xf] %v873
        %890 = vst [vmem:[%s382 + $0xc] sm:$0xf] %v874
        %891 = vst [vmem:[%s382 + $0x10] sm:$0xf] %v875
        %892 = vst [vmem:[%s382 + $0x14] sm:$0xf] %v876
        %893 = vst [vmem:[%s382 + $0x18] sm:$0xf] %v877
        %894 = vst [vmem:[%s382 + $0x1c] sm:$0xf] %v878
      $region56: #{gnn_forward.2} parent=43 // pred_fallthru
        _
      %s895 = smul.u32 8, %s33
      %p896 = scmp.lt.s32.totalorder %s895, 15
      %s897 = scalar_select %p896, %s895, 15
      %s898 = smul.addr %s897, 4
      %s899 = scalar_lea.vmem %s8, %s898
      // Predicated region
      $region57: #{gnn_forward.2} parent=43 // pred_check
        %p900 = pneg %p215
      $region58: #{gnn_forward.2} parent=43 // pred_check_branch
        %902 = sbr.rel (%p900) target = $region60
      $region59: #{gnn_forward.2} parent=43 // pred_region
        %s903 = smul.u32 8, %s33
      $region60: #{gnn_forward.2} parent=43 // pred_fallthru
        _
    $region44: #{gnn_forward.2} parent=5 // pred_fallthru
      _
    %p904 = scmp.le.s32.totalorder 2, %s24
    // Predicated region
    $region61: #{gnn_forward.2} parent=5 // pred_check
      %p905 = pneg %p904
    $region62: #{gnn_forward.2} parent=5 // pred_check_branch
      %907 = sbr.rel (%p905) target = $region64
    $region63: #{gnn_forward.2} parent=5 // pred_region
      %s908 = ssub.s32 %s24, 2
      // Predicated region
      $region65: #{gnn_forward.2} parent=63 // pred_check
        %p909 = pneg %p221
      $region66: #{gnn_forward.2} parent=63 // pred_check_branch
        %911 = sbr.rel (%p909) target = $region68
      $region67: #{gnn_forward.2} parent=63 // pred_region
        %s912 = smul.u32 8, %s35
        %p913 = scmp.lt.s32.totalorder %s912, 15
        %s914 = scalar_select %p913, %s912, 15
        %s915 = smul.addr %s914, 4
        %s916 = scalar_lea.vmem %s8, %s915
      $region68: #{gnn_forward.2} parent=63 // pred_fallthru
        _
    $region64: #{gnn_forward.2} parent=5 // pred_fallthru
      _
  $region6: #{gnn_forward.2} parent=0 // loop_footer
    %s28 = sadd.s32 1, %s24
  $region7: #{gnn_forward.2} parent=0 // loop_footer_branch
    %23 = sbr.rel target = $region3
  $region8: #{gnn_forward.2} parent=0 // loop_exit
    _

</llo_original>
